<compile_context>
chip_gen: v7x
topology: tpu7x:2x2x1
jax: 0.10.0
libtpu: 0.0.40
codegen_flags: <defaults>
</compile_context>

<pallas_src>
import functools

import jax
import jax.numpy as jnp
from jax.experimental import pallas as pl
from jax.experimental.pallas import tpu as pltpu


def _round_up(x, m):
    return ((x + m - 1) // m) * m


def _cdiv(a, b):
    return -(-a // b)


# ----------------------------------------------------------------------------
# Fused kernel: news encoder (CNN + attention + LayerNorm) per batch tile,
# accumulated into VMEM scratch; GRU over the accumulated reps at the last step.
# ----------------------------------------------------------------------------
def _fused_user_encoder_kernel(T_valid,
                               len_ref,                       # SMEM (prefetch)
                               x_ref, cw_ref, cb_ref,         # conv
                               aw_ref, ab_ref, aq_ref,        # attention
                               g_ref, beta_ref,               # LayerNorm
                               wih_ref, whh_ref, bih_ref, bhh_ref,   # GRU
                               o_ref,                         # output (1, F)
                               rep_ref, xproj_ref):           # VMEM scratch
    TB, Tp, D = x_ref.shape
    F_ = g_ref.shape[-1]
    W = cw_ref.shape[0] // D
    Tc = Tp - (W - 1)                       # conv output rows per news (mult of 8)
    b = pl.program_id(0)

    # ------------------ news encoder for this batch tile ------------------
    x = x_ref[...]                                                # (TB, Tp, D) bf16

    # im2col built in VMEM from cheap slices of the padded tile; HBM only sees x.
    xcol = jnp.concatenate([x[:, w:w + Tc, :] for w in range(W)], axis=-1)
    x2 = xcol.reshape(TB * Tc, W * D)                             # Tc % 8 == 0 -> aligned

    # Conv as ONE MXU matmul over all TB*Tc rows (bf16 operands, f32 acc) + ReLU.
    h = jnp.dot(x2, cw_ref[...], preferred_element_type=jnp.float32) + cb_ref[...]
    h = jnp.maximum(h, 0.0)                                       # (TB*Tc, F) f32

    # Additive attention: projection on the MXU; scores / pooling on VPU + XLU.
    proj = jnp.tanh(
        jnp.dot(h.astype(jnp.bfloat16), aw_ref[...],
                preferred_element_type=jnp.float32) + ab_ref[...])      # (TB*Tc, Q)
    proj3 = proj.reshape(TB, Tc, proj.shape[-1])                  # (TB, Tc, Q)
    scores = jnp.sum(proj3 * aq_ref[...], axis=-1)                # (TB, Tc)

    if Tc != T_valid:   # mask the sublane-padding positions out of the softmax
        t_idx = jax.lax.broadcasted_iota(jnp.int32, (TB, Tc), 1)
        scores = jnp.where(t_idx < T_valid, scores, -1e30)

    m = jnp.max(scores, axis=-1, keepdims=True)
    e = jnp.exp(scores - m)
    denom = jnp.sum(e, axis=-1, keepdims=True)
    alpha = e * pl.reciprocal(denom, approx=True)                 # (TB, Tc)

    h3 = h.reshape(TB, Tc, F_)
    pooled = jnp.sum(alpha[:, :, None] * h3, axis=1)              # (TB, F)

    # F.dropout(p=0.2, training=False) -> identity.
    # TODO(synk): training-mode dropout (random mask) not implemented.

    # LayerNorm(num_filters), eps = 1e-5 (PyTorch default).
    mean = jnp.mean(pooled, axis=-1, keepdims=True)
    var = jnp.mean((pooled - mean) ** 2, axis=-1, keepdims=True)
    normed = (pooled - mean) * jax.lax.rsqrt(var + 1e-5)
    normed = normed * g_ref[...] + beta_ref[...]                  # (TB, F)

    rep_ref[pl.ds(pl.multiple_of(b * TB, 8), TB), :] = normed

    # -------- GRU over the accumulated reps (only on the last grid step) --------
    # pack_padded_sequence with batch 1 just truncates to L = clicked_new_length[0],
    # so last_hidden is the GRU cell run over the first L rows of new_rep.
    @pl.when(b == pl.num_programs(0) - 1)
    def _():
        L = len_ref[0]

        # Hoisted input projections: one MXU-efficient (Bp, F) @ (F, 3F) matmul.
        rep = rep_ref[...]                                        # (Bp, F) f32
        xproj_ref[...] = (
            jnp.dot(rep.astype(jnp.bfloat16), wih_ref[...],
                    preferred_element_type=jnp.float32) + bih_ref[...])  # (Bp, 3F)

        w_hh = whh_ref[...]                                       # (F, 3F) bf16
        b_hh = bhh_ref[...]                                       # (1, 3F) f32

        def step(t, hprev):
            hg = jnp.dot(hprev.astype(jnp.bfloat16), w_hh,
                         preferred_element_type=jnp.float32) + b_hh      # (1, 3F)
            xg = xproj_ref[pl.ds(t, 1), :]                               # (1, 3F)
            r = jax.nn.sigmoid(xg[:, :F_] + hg[:, :F_])
            z = jax.nn.sigmoid(xg[:, F_:2 * F_] + hg[:, F_:2 * F_])
            n = jnp.tanh(xg[:, 2 * F_:] + r * hg[:, 2 * F_:])
            return (1.0 - z) * n + z * hprev

        h_last = jax.lax.fori_loop(0, L, step, jnp.zeros((1, F_), jnp.float32))
        o_ref[...] = h_last                                       # (1, F)


def user_encoder_forward(clicked_new_length, word_embedding, params, window_size,
                         *, max_batch_tile=64):
    """clicked_new_length: [1] int, word_embedding: [B, T, D] f32 -> [1, F] f32."""
    B, T, D = word_embedding.shape
    W = window_size
    assert W % 2 == 1, "'same' conv padding here assumes an odd window size"
    pad = (W - 1) // 2

    F_ = params["conv_w"].shape[1]
    Q = params["att_w"].shape[1]

    # Conv output rows padded to a multiple of 8 sublanes -> all in-kernel
    # reshapes stay (8,128)-tile aligned; padded rows are masked in the softmax.
    Tc = _round_up(T, 8)
    Tp = Tc + (W - 1)

    # Batch tile: multiple of 8, sized to minimize zero-padding waste.
    n_tiles = max(1, _cdiv(B, max_batch_tile))
    TB = _round_up(_cdiv(B, n_tiles), 8)
    Bp = _round_up(B, TB)
    grid = (Bp // TB,)

    # bf16 inputs / matmul weights halve the dominant HBM read and VMEM blocks.
    x_bf16 = word_embedding.astype(jnp.bfloat16)
    xpad = jnp.pad(x_bf16, ((0, Bp - B), (pad, Tp - T - pad), (0, 0)))

    out = pl.pallas_call(
        functools.partial(_fused_user_encoder_kernel, T),
        out_shape=jax.ShapeDtypeStruct((1, F_), jnp.float32),
        grid_spec=pltpu.PrefetchScalarGridSpec(
            num_scalar_prefetch=1,                 # clicked_new_length -> SMEM
            grid=grid,
            in_specs=[
                pl.BlockSpec((TB, Tp, D), lambda b, l: (b, 0, 0)),    # word embeddings
                # Grid-invariant weights (tiny here; at production sizes consider
                # pipeline_mode=pl.Buffered(1) to single-buffer them).
                pl.BlockSpec((W * D, F_), lambda b, l: (0, 0)),       # conv W (im2col)
                pl.BlockSpec((1, F_), lambda b, l: (0, 0)),           # conv b
                pl.BlockSpec((F_, Q), lambda b, l: (0, 0)),           # attn proj W
                pl.BlockSpec((1, Q), lambda b, l: (0, 0)),            # attn proj b
                pl.BlockSpec((1, Q), lambda b, l: (0, 0)),            # attn query
                pl.BlockSpec((1, F_), lambda b, l: (0, 0)),           # LN gamma
                pl.BlockSpec((1, F_), lambda b, l: (0, 0)),           # LN beta
                pl.BlockSpec((F_, 3 * F_), lambda b, l: (0, 0)),      # GRU W_ih (fused r|z|n)
                pl.BlockSpec((F_, 3 * F_), lambda b, l: (0, 0)),      # GRU W_hh (fused r|z|n)
                pl.BlockSpec((1, 3 * F_), lambda b, l: (0, 0)),       # GRU b_ih
                pl.BlockSpec((1, 3 * F_), lambda b, l: (0, 0)),       # GRU b_hh
            ],
            out_specs=pl.BlockSpec((1, F_), lambda b, l: (0, 0)),
            scratch_shapes=[
                pltpu.VMEM((Bp, F_), jnp.float32),        # new_rep accumulator
                pltpu.VMEM((Bp, 3 * F_), jnp.float32),    # hoisted GRU input projections
            ],
        ),
        # "arbitrary": the last grid step consumes scratch written by all prior steps.
        compiler_params=pltpu.CompilerParams(dimension_semantics=("arbitrary",)),
    )(
        clicked_new_length.astype(jnp.int32),
        xpad,
        params["conv_w"].astype(jnp.bfloat16), params["conv_b"],
        params["att_w"].astype(jnp.bfloat16), params["att_b"], params["att_q"],
        params["ln_gamma"], params["ln_beta"],
        params["gru_w_ih"].astype(jnp.bfloat16), params["gru_w_hh"].astype(jnp.bfloat16),
        params["gru_b_ih"], params["gru_b_hh"],
    )
    return out


def init_params(key, word_dim, num_filters, query_vector_dim, window_size):
    ks = jax.random.split(key, 9)
    s = 0.1
    F_ = num_filters
    return {
        # conv weight in im2col-matmul layout [W*D, F]  (== Conv2d weight [F,1,W,D]
        # with conv_w[w*D + d, f] = weight[f, 0, w, d]).
        "conv_w": s * jax.random.normal(ks[0], (window_size * word_dim, F_), jnp.float32),
        "conv_b": s * jax.random.normal(ks[1], (1, F_), jnp.float32),
        "att_w":  s * jax.random.normal(ks[2], (F_, query_vector_dim), jnp.float32),
        "att_b":  s * jax.random.normal(ks[3], (1, query_vector_dim), jnp.float32),
        "att_q":  s * jax.random.normal(ks[4], (1, query_vector_dim), jnp.float32),
        "ln_gamma": jnp.ones((1, F_), jnp.float32),
        "ln_beta": jnp.zeros((1, F_), jnp.float32),
        # GRU (num_layers=1), gates fused along the last dim in (r, z, n) order and
        # pre-transposed for right-multiplication:
        #   gru_w_ih[:, g*F:(g+1)*F] = weight_ih_l0[g*F:(g+1)*F, :].T   (same for hh)
        #   gru_b_ih[0, g*F:(g+1)*F] = bias_ih_l0[g*F:(g+1)*F]          (same for hh)
        "gru_w_ih": s * jax.random.normal(ks[5], (F_, 3 * F_), jnp.float32),
        "gru_w_hh": s * jax.random.normal(ks[6], (F_, 3 * F_), jnp.float32),
        "gru_b_ih": s * jax.random.normal(ks[7], (1, 3 * F_), jnp.float32),
        "gru_b_hh": s * jax.random.normal(ks[8], (1, 3 * F_), jnp.float32),
    }


if __name__ == "__main__":
    # Small shapes consistent with the module's forward.
    B = 16                # number of clicked news (GRU sequence capacity)
    T = 8                 # title_word_size
    D = 16                # word_dim
    F_ = 32               # num_filters
    Q = 16                # query_vector_dim
    W = 3                 # window_sizes
    L = 12                # clicked_new_length[0] (<= B)

    key = jax.random.PRNGKey(0)
    k_x, k_p = jax.random.split(key)
    word_embedding = jax.random.normal(k_x, (B, T, D), jnp.float32)
    params = init_params(k_p, D, F_, Q, W)
    clicked_new_length = jnp.array([L], jnp.int32)

    fwd = jax.jit(user_encoder_forward, static_argnames=("window_size",))
    out = fwd(clicked_new_length, word_embedding, params, window_size=W)
    out = jax.block_until_ready(out)
    assert out.shape == (1, F_)
    print("KERNEL_OK")
</pallas_src>

<mosaic_0001>
module attributes {stable_mosaic.version = 11 : i64} {
  func.func @_fused_user_encoder_kernel(%arg0: i32, %arg1: memref<1xi32, #tpu.memory_space<smem>>, %arg2: memref<16x10x16xbf16, #tpu.memory_space<vmem>>, %arg3: memref<48x32xbf16, #tpu.memory_space<vmem>>, %arg4: memref<1x32xf32, #tpu.memory_space<vmem>>, %arg5: memref<32x16xbf16, #tpu.memory_space<vmem>>, %arg6: memref<1x16xf32, #tpu.memory_space<vmem>>, %arg7: memref<1x16xf32, #tpu.memory_space<vmem>>, %arg8: memref<1x32xf32, #tpu.memory_space<vmem>>, %arg9: memref<1x32xf32, #tpu.memory_space<vmem>>, %arg10: memref<32x96xbf16, #tpu.memory_space<vmem>>, %arg11: memref<32x96xbf16, #tpu.memory_space<vmem>>, %arg12: memref<1x96xf32, #tpu.memory_space<vmem>>, %arg13: memref<1x96xf32, #tpu.memory_space<vmem>>, %arg14: memref<1x32xf32, #tpu.memory_space<vmem>>, %arg15: memref<16x32xf32, #tpu.memory_space<vmem>>, %arg16: memref<16x96xf32, #tpu.memory_space<vmem>>) attributes {dimension_semantics = [#tpu.dimension_semantics<arbitrary>], iteration_bounds = array<i64: 1>, scalar_prefetch = 1 : i64, scratch_operands = 2 : i64, tpu.core_type = #tpu.core_type<tc>, window_params = [{transform_indices = @transform_0, window_bounds = array<i64: 16, 10, 16>}, {pipeline_mode = #tpu.pipeline_mode<synchronous>, transform_indices = @transform_1, window_bounds = array<i64: 48, 32>}, {pipeline_mode = #tpu.pipeline_mode<synchronous>, transform_indices = @transform_2, window_bounds = array<i64: 1, 32>}, {pipeline_mode = #tpu.pipeline_mode<synchronous>, transform_indices = @transform_3, window_bounds = array<i64: 32, 16>}, {pipeline_mode = #tpu.pipeline_mode<synchronous>, transform_indices = @transform_4, window_bounds = array<i64: 1, 16>}, {pipeline_mode = #tpu.pipeline_mode<synchronous>, transform_indices = @transform_5, window_bounds = array<i64: 1, 16>}, {pipeline_mode = #tpu.pipeline_mode<synchronous>, transform_indices = @transform_6, window_bounds = array<i64: 1, 32>}, {pipeline_mode = #tpu.pipeline_mode<synchronous>, transform_indices = @transform_7, window_bounds = array<i64: 1, 32>}, {pipeline_mode = #tpu.pipeline_mode<synchronous>, transform_indices = @transform_8, window_bounds = array<i64: 32, 96>}, {pipeline_mode = #tpu.pipeline_mode<synchronous>, transform_indices = @transform_9, window_bounds = array<i64: 32, 96>}, {pipeline_mode = #tpu.pipeline_mode<synchronous>, transform_indices = @transform_10, window_bounds = array<i64: 1, 96>}, {pipeline_mode = #tpu.pipeline_mode<synchronous>, transform_indices = @transform_11, window_bounds = array<i64: 1, 96>}, {pipeline_mode = #tpu.pipeline_mode<synchronous>, transform_indices = @transform_12, window_bounds = array<i64: 1, 32>}]} {
    %c0 = arith.constant 0 : index
    %c0_0 = arith.constant 0 : index
    %c0_1 = arith.constant 0 : index
    %0 = vector.load %arg2[%c0, %c0_0, %c0_1] : memref<16x10x16xbf16, #tpu.memory_space<vmem>>, vector<16x10x16xbf16>
    %1 = vector.extract_strided_slice %0 {offsets = [0, 0, 0], sizes = [16, 8, 16], strides = [1, 1, 1]} : vector<16x10x16xbf16> to vector<16x8x16xbf16>
    %2 = vector.extract_strided_slice %0 {offsets = [0, 1, 0], sizes = [16, 8, 16], strides = [1, 1, 1]} : vector<16x10x16xbf16> to vector<16x8x16xbf16>
    %3 = vector.extract_strided_slice %0 {offsets = [0, 2, 0], sizes = [16, 8, 16], strides = [1, 1, 1]} : vector<16x10x16xbf16> to vector<16x8x16xbf16>
    %4 = tpu.concatenate %1, %2, %3 in 2 : vector<16x8x16xbf16>, vector<16x8x16xbf16>, vector<16x8x16xbf16> -> vector<16x8x48xbf16>
    %5 = vector.shape_cast %4 : vector<16x8x48xbf16> to vector<128x48xbf16>
    %c0_2 = arith.constant 0 : index
    %c0_3 = arith.constant 0 : index
    %6 = vector.load %arg3[%c0_2, %c0_3] : memref<48x32xbf16, #tpu.memory_space<vmem>>, vector<48x32xbf16>
    %cst = arith.constant dense<0.000000e+00> : vector<128x32xf32>
    %7 = tpu.matmul %5, %6, %cst {dimension_numbers = #tpu.dot_dimension_numbers<[1], [0], [0], [1], [0, 0, 1, 1], [], []>} : vector<128x48xbf16>, vector<48x32xbf16>, vector<128x32xf32> -> vector<128x32xf32>
    %c0_4 = arith.constant 0 : index
    %c0_5 = arith.constant 0 : index
    %8 = vector.load %arg4[%c0_4, %c0_5] : memref<1x32xf32, #tpu.memory_space<vmem>>, vector<1x32xf32>
    %9 = vector.broadcast %8 : vector<1x32xf32> to vector<128x32xf32>
    %10 = arith.addf %7, %9 : vector<128x32xf32>
    %cst_6 = arith.constant 0.000000e+00 : f32
    %11 = vector.broadcast %cst_6 : f32 to vector<128x32xf32>
    %12 = arith.maximumf %10, %11 : vector<128x32xf32>
    %13 = arith.truncf %12 : vector<128x32xf32> to vector<128x32xbf16>
    %c0_7 = arith.constant 0 : index
    %c0_8 = arith.constant 0 : index
    %14 = vector.load %arg5[%c0_7, %c0_8] : memref<32x16xbf16, #tpu.memory_space<vmem>>, vector<32x16xbf16>
    %cst_9 = arith.constant dense<0.000000e+00> : vector<128x16xf32>
    %15 = tpu.matmul %13, %14, %cst_9 {dimension_numbers = #tpu.dot_dimension_numbers<[1], [0], [0], [1], [0, 0, 1, 1], [], []>} : vector<128x32xbf16>, vector<32x16xbf16>, vector<128x16xf32> -> vector<128x16xf32>
    %c0_10 = arith.constant 0 : index
    %c0_11 = arith.constant 0 : index
    %16 = vector.load %arg6[%c0_10, %c0_11] : memref<1x16xf32, #tpu.memory_space<vmem>>, vector<1x16xf32>
    %17 = vector.broadcast %16 : vector<1x16xf32> to vector<128x16xf32>
    %18 = arith.addf %15, %17 : vector<128x16xf32>
    %19 = math.tanh %18 : vector<128x16xf32>
    %20 = vector.shape_cast %19 : vector<128x16xf32> to vector<16x8x16xf32>
    %c0_12 = arith.constant 0 : index
    %c0_13 = arith.constant 0 : index
    %21 = vector.load %arg7[%c0_12, %c0_13] : memref<1x16xf32, #tpu.memory_space<vmem>>, vector<1x16xf32>
    %22 = vector.shape_cast %21 : vector<1x16xf32> to vector<1x1x16xf32>
    %23 = vector.broadcast %22 : vector<1x1x16xf32> to vector<16x8x16xf32>
    %24 = arith.mulf %20, %23 : vector<16x8x16xf32>
    %cst_14 = arith.constant dense<0.000000e+00> : vector<16x8xf32>
    %25 = vector.multi_reduction <add>, %24, %cst_14 [2] : vector<16x8x16xf32> to vector<16x8xf32>
    %cst_15 = arith.constant dense<0xFF800000> : vector<16xf32>
    %26 = vector.multi_reduction <maximumf>, %25, %cst_15 [1] : vector<16x8xf32> to vector<16xf32>
    %27 = vector.shape_cast %26 : vector<16xf32> to vector<16x1xf32>
    %28 = vector.broadcast %27 : vector<16x1xf32> to vector<16x8xf32>
    %29 = arith.subf %25, %28 : vector<16x8xf32>
    %30 = math.exp %29 : vector<16x8xf32>
    %cst_16 = arith.constant dense<0.000000e+00> : vector<16xf32>
    %31 = vector.multi_reduction <add>, %30, %cst_16 [1] : vector<16x8xf32> to vector<16xf32>
    %32 = vector.shape_cast %31 : vector<16xf32> to vector<16x1xf32>
    %33 = tpu.reciprocal %32 {approx = true} : vector<16x1xf32> -> vector<16x1xf32>
    %34 = vector.broadcast %33 : vector<16x1xf32> to vector<16x8xf32>
    %35 = arith.mulf %30, %34 : vector<16x8xf32>
    %36 = vector.shape_cast %12 : vector<128x32xf32> to vector<16x8x32xf32>
    %37 = vector.shape_cast %35 : vector<16x8xf32> to vector<16x8x1xf32>
    %38 = vector.broadcast %37 : vector<16x8x1xf32> to vector<16x8x32xf32>
    %39 = arith.mulf %38, %36 : vector<16x8x32xf32>
    %cst_17 = arith.constant dense<0.000000e+00> : vector<16x32xf32>
    %40 = vector.multi_reduction <add>, %39, %cst_17 [1] : vector<16x8x32xf32> to vector<16x32xf32>
    %cst_18 = arith.constant dense<0.000000e+00> : vector<16xf32>
    %41 = vector.multi_reduction <add>, %40, %cst_18 [1] : vector<16x32xf32> to vector<16xf32>
    %42 = vector.shape_cast %41 : vector<16xf32> to vector<16x1xf32>
    %cst_19 = arith.constant 3.200000e+01 : f32
    %43 = vector.broadcast %cst_19 : f32 to vector<16x1xf32>
    %44 = arith.divf %42, %43 : vector<16x1xf32>
    %45 = vector.broadcast %44 : vector<16x1xf32> to vector<16x32xf32>
    %46 = arith.subf %40, %45 : vector<16x32xf32>
    %47 = arith.mulf %46, %46 : vector<16x32xf32>
    %cst_20 = arith.constant dense<0.000000e+00> : vector<16xf32>
    %48 = vector.multi_reduction <add>, %47, %cst_20 [1] : vector<16x32xf32> to vector<16xf32>
    %49 = vector.shape_cast %48 : vector<16xf32> to vector<16x1xf32>
    %cst_21 = arith.constant 3.200000e+01 : f32
    %50 = vector.broadcast %cst_21 : f32 to vector<16x1xf32>
    %51 = arith.divf %49, %50 : vector<16x1xf32>
    %52 = vector.broadcast %44 : vector<16x1xf32> to vector<16x32xf32>
    %53 = arith.subf %40, %52 : vector<16x32xf32>
    %cst_22 = arith.constant 9.99999974E-6 : f32
    %54 = vector.broadcast %cst_22 : f32 to vector<16x1xf32>
    %55 = arith.addf %51, %54 : vector<16x1xf32>
    %56 = math.rsqrt %55 : vector<16x1xf32>
    %57 = vector.broadcast %56 : vector<16x1xf32> to vector<16x32xf32>
    %58 = arith.mulf %53, %57 : vector<16x32xf32>
    %c0_23 = arith.constant 0 : index
    %c0_24 = arith.constant 0 : index
    %59 = vector.load %arg8[%c0_23, %c0_24] : memref<1x32xf32, #tpu.memory_space<vmem>>, vector<1x32xf32>
    %60 = vector.broadcast %59 : vector<1x32xf32> to vector<16x32xf32>
    %61 = arith.mulf %58, %60 : vector<16x32xf32>
    %c0_25 = arith.constant 0 : index
    %c0_26 = arith.constant 0 : index
    %62 = vector.load %arg9[%c0_25, %c0_26] : memref<1x32xf32, #tpu.memory_space<vmem>>, vector<1x32xf32>
    %63 = vector.broadcast %62 : vector<1x32xf32> to vector<16x32xf32>
    %64 = arith.addf %61, %63 : vector<16x32xf32>
    %c16_i32 = arith.constant 16 : i32
    %65 = arith.muli %arg0, %c16_i32 : i32
    %66 = tpu.assume_multiple %65, 8 : i32
    %67 = arith.index_cast %66 : i32 to index
    %c0_27 = arith.constant 0 : index
    %68 = vector.load %arg15[%67, %c0_27] : memref<16x32xf32, #tpu.memory_space<vmem>>, vector<16x32xf32>
    tpu.vector_store %arg15[%67, %c0_27], %64 {strides = array<i32>} : memref<16x32xf32, #tpu.memory_space<vmem>>, vector<16x32xf32>,
    %c0_i32 = arith.constant 0 : i32
    %69 = arith.cmpi eq, %arg0, %c0_i32 : i32
    %70 = arith.extui %69 : i1 to i32
    %c0_i32_28 = arith.constant 0 : i32
    %71 = arith.cmpi ne, %70, %c0_i32_28 : i32
    scf.if %71 {
      %c0_29 = arith.constant 0 : index
      %72 = memref.load %arg1[%c0_29] : memref<1xi32, #tpu.memory_space<smem>>
      %c0_30 = arith.constant 0 : index
      %c0_31 = arith.constant 0 : index
      %73 = vector.load %arg15[%c0_30, %c0_31] : memref<16x32xf32, #tpu.memory_space<vmem>>, vector<16x32xf32>
      %74 = arith.truncf %73 : vector<16x32xf32> to vector<16x32xbf16>
      %c0_32 = arith.constant 0 : index
      %c0_33 = arith.constant 0 : index
      %75 = vector.load %arg10[%c0_32, %c0_33] : memref<32x96xbf16, #tpu.memory_space<vmem>>, vector<32x96xbf16>
      %cst_34 = arith.constant dense<0.000000e+00> : vector<16x96xf32>
      %76 = tpu.matmul %74, %75, %cst_34 {dimension_numbers = #tpu.dot_dimension_numbers<[1], [0], [0], [1], [0, 0, 1, 1], [], []>} : vector<16x32xbf16>, vector<32x96xbf16>, vector<16x96xf32> -> vector<16x96xf32>
      %c0_35 = arith.constant 0 : index
      %c0_36 = arith.constant 0 : index
      %77 = vector.load %arg12[%c0_35, %c0_36] : memref<1x96xf32, #tpu.memory_space<vmem>>, vector<1x96xf32>
      %78 = vector.broadcast %77 : vector<1x96xf32> to vector<16x96xf32>
      %79 = arith.addf %76, %78 : vector<16x96xf32>
      %c0_37 = arith.constant 0 : index
      %c0_38 = arith.constant 0 : index
      %80 = vector.load %arg16[%c0_37, %c0_38] : memref<16x96xf32, #tpu.memory_space<vmem>>, vector<16x96xf32>
      tpu.vector_store %arg16[%c0_37, %c0_38], %79 {strides = array<i32>} : memref<16x96xf32, #tpu.memory_space<vmem>>, vector<16x96xf32>,
      %c0_39 = arith.constant 0 : index
      %c0_40 = arith.constant 0 : index
      %81 = vector.load %arg11[%c0_39, %c0_40] : memref<32x96xbf16, #tpu.memory_space<vmem>>, vector<32x96xbf16>
      %c0_41 = arith.constant 0 : index
      %c0_42 = arith.constant 0 : index
      %82 = vector.load %arg13[%c0_41, %c0_42] : memref<1x96xf32, #tpu.memory_space<vmem>>, vector<1x96xf32>
      %cst_43 = arith.constant 0.000000e+00 : f32
      %83 = vector.broadcast %cst_43 : f32 to vector<1x32xf32>
      %c0_i32_44 = arith.constant 0 : i32
      %84 = arith.subi %72, %c0_i32_44 : i32
      %85 = arith.addi %c0_i32_44, %84 : i32
      %c1_i32 = arith.constant 1 : i32
      %86 = scf.for %arg17 = %c0_i32_44 to %85 step %c1_i32 iter_args(%arg18 = %83) -> (vector<1x32xf32>)  : i32 {
        %88 = arith.truncf %arg18 : vector<1x32xf32> to vector<1x32xbf16>
        %cst_47 = arith.constant dense<0.000000e+00> : vector<1x96xf32>
        %89 = tpu.matmul %88, %81, %cst_47 {dimension_numbers = #tpu.dot_dimension_numbers<[1], [0], [0], [1], [0, 0, 1, 1], [], []>} : vector<1x32xbf16>, vector<32x96xbf16>, vector<1x96xf32> -> vector<1x96xf32>
        %90 = arith.addf %89, %82 : vector<1x96xf32>
        %91 = arith.index_cast %arg17 : i32 to index
        %c0_48 = arith.constant 0 : index
        %92 = vector.load %arg16[%91, %c0_48] : memref<16x96xf32, #tpu.memory_space<vmem>>, vector<1x96xf32>
        %93 = vector.extract_strided_slice %92 {offsets = [0, 0], sizes = [1, 32], strides = [1, 1]} : vector<1x96xf32> to vector<1x32xf32>
        %94 = vector.extract_strided_slice %90 {offsets = [0, 0], sizes = [1, 32], strides = [1, 1]} : vector<1x96xf32> to vector<1x32xf32>
        %95 = arith.addf %93, %94 : vector<1x32xf32>
        %96 = arith.negf %95 : vector<1x32xf32>
        %97 = math.exp %96 : vector<1x32xf32>
        %cst_49 = arith.constant 1.000000e+00 : f32
        %98 = vector.broadcast %cst_49 : f32 to vector<1x32xf32>
        %99 = arith.addf %98, %97 : vector<1x32xf32>
        %100 = arith.divf %98, %99 : vector<1x32xf32>
        %101 = vector.extract_strided_slice %92 {offsets = [0, 32], sizes = [1, 32], strides = [1, 1]} : vector<1x96xf32> to vector<1x32xf32>
        %102 = vector.extract_strided_slice %90 {offsets = [0, 32], sizes = [1, 32], strides = [1, 1]} : vector<1x96xf32> to vector<1x32xf32>
        %103 = arith.addf %101, %102 : vector<1x32xf32>
        %104 = arith.negf %103 : vector<1x32xf32>
        %105 = math.exp %104 : vector<1x32xf32>
        %cst_50 = arith.constant 1.000000e+00 : f32
        %106 = vector.broadcast %cst_50 : f32 to vector<1x32xf32>
        %107 = arith.addf %106, %105 : vector<1x32xf32>
        %108 = arith.divf %106, %107 : vector<1x32xf32>
        %109 = vector.extract_strided_slice %92 {offsets = [0, 64], sizes = [1, 32], strides = [1, 1]} : vector<1x96xf32> to vector<1x32xf32>
        %110 = vector.extract_strided_slice %90 {offsets = [0, 64], sizes = [1, 32], strides = [1, 1]} : vector<1x96xf32> to vector<1x32xf32>
        %111 = arith.mulf %100, %110 : vector<1x32xf32>
        %112 = arith.addf %109, %111 : vector<1x32xf32>
        %113 = math.tanh %112 : vector<1x32xf32>
        %cst_51 = arith.constant 1.000000e+00 : f32
        %114 = vector.broadcast %cst_51 : f32 to vector<1x32xf32>
        %115 = arith.subf %114, %108 : vector<1x32xf32>
        %116 = arith.mulf %115, %113 : vector<1x32xf32>
        %117 = arith.mulf %108, %arg18 : vector<1x32xf32>
        %118 = arith.addf %116, %117 : vector<1x32xf32>
        scf.yield %118 : vector<1x32xf32>
      }
      %c0_45 = arith.constant 0 : index
      %c0_46 = arith.constant 0 : index
      %87 = vector.load %arg14[%c0_45, %c0_46] : memref<1x32xf32, #tpu.memory_space<vmem>>, vector<1x32xf32>
      tpu.vector_store %arg14[%c0_45, %c0_46], %86 {strides = array<i32>} : memref<1x32xf32, #tpu.memory_space<vmem>>, vector<1x32xf32>,
    } else {
    }
    return
  }
  func.func @transform_0(%arg0: i32, %arg1: memref<1xi32, #tpu.memory_space<smem>>) -> (i32, i32, i32) {
    %c0_i32 = arith.constant 0 : i32
    %c0_i32_0 = arith.constant 0 : i32
    %c0_i32_1 = arith.constant 0 : i32
    return %arg0, %c0_i32, %c0_i32_0 : i32, i32, i32
  }
  func.func @transform_1(%arg0: i32, %arg1: memref<1xi32, #tpu.memory_space<smem>>) -> (i32, i32) {
    %c0_i32 = arith.constant 0 : i32
    %c0_i32_0 = arith.constant 0 : i32
    %c0_i32_1 = arith.constant 0 : i32
    return %c0_i32, %c0_i32_0 : i32, i32
  }
  func.func @transform_2(%arg0: i32, %arg1: memref<1xi32, #tpu.memory_space<smem>>) -> (i32, i32) {
    %c0_i32 = arith.constant 0 : i32
    %c0_i32_0 = arith.constant 0 : i32
    %c0_i32_1 = arith.constant 0 : i32
    return %c0_i32, %c0_i32_0 : i32, i32
  }
  func.func @transform_3(%arg0: i32, %arg1: memref<1xi32, #tpu.memory_space<smem>>) -> (i32, i32) {
    %c0_i32 = arith.constant 0 : i32
    %c0_i32_0 = arith.constant 0 : i32
    %c0_i32_1 = arith.constant 0 : i32
    return %c0_i32, %c0_i32_0 : i32, i32
  }
  func.func @transform_4(%arg0: i32, %arg1: memref<1xi32, #tpu.memory_space<smem>>) -> (i32, i32) {
    %c0_i32 = arith.constant 0 : i32
    %c0_i32_0 = arith.constant 0 : i32
    %c0_i32_1 = arith.constant 0 : i32
    return %c0_i32, %c0_i32_0 : i32, i32
  }
  func.func @transform_5(%arg0: i32, %arg1: memref<1xi32, #tpu.memory_space<smem>>) -> (i32, i32) {
    %c0_i32 = arith.constant 0 : i32
    %c0_i32_0 = arith.constant 0 : i32
    %c0_i32_1 = arith.constant 0 : i32
    return %c0_i32, %c0_i32_0 : i32, i32
  }
  func.func @transform_6(%arg0: i32, %arg1: memref<1xi32, #tpu.memory_space<smem>>) -> (i32, i32) {
    %c0_i32 = arith.constant 0 : i32
    %c0_i32_0 = arith.constant 0 : i32
    %c0_i32_1 = arith.constant 0 : i32
    return %c0_i32, %c0_i32_0 : i32, i32
  }
  func.func @transform_7(%arg0: i32, %arg1: memref<1xi32, #tpu.memory_space<smem>>) -> (i32, i32) {
    %c0_i32 = arith.constant 0 : i32
    %c0_i32_0 = arith.constant 0 : i32
    %c0_i32_1 = arith.constant 0 : i32
    return %c0_i32, %c0_i32_0 : i32, i32
  }
  func.func @transform_8(%arg0: i32, %arg1: memref<1xi32, #tpu.memory_space<smem>>) -> (i32, i32) {
    %c0_i32 = arith.constant 0 : i32
    %c0_i32_0 = arith.constant 0 : i32
    %c0_i32_1 = arith.constant 0 : i32
    return %c0_i32, %c0_i32_0 : i32, i32
  }
  func.func @transform_9(%arg0: i32, %arg1: memref<1xi32, #tpu.memory_space<smem>>) -> (i32, i32) {
    %c0_i32 = arith.constant 0 : i32
    %c0_i32_0 = arith.constant 0 : i32
    %c0_i32_1 = arith.constant 0 : i32
    return %c0_i32, %c0_i32_0 : i32, i32
  }
  func.func @transform_10(%arg0: i32, %arg1: memref<1xi32, #tpu.memory_space<smem>>) -> (i32, i32) {
    %c0_i32 = arith.constant 0 : i32
    %c0_i32_0 = arith.constant 0 : i32
    %c0_i32_1 = arith.constant 0 : i32
    return %c0_i32, %c0_i32_0 : i32, i32
  }
  func.func @transform_11(%arg0: i32, %arg1: memref<1xi32, #tpu.memory_space<smem>>) -> (i32, i32) {
    %c0_i32 = arith.constant 0 : i32
    %c0_i32_0 = arith.constant 0 : i32
    %c0_i32_1 = arith.constant 0 : i32
    return %c0_i32, %c0_i32_0 : i32, i32
  }
  func.func @transform_12(%arg0: i32, %arg1: memref<1xi32, #tpu.memory_space<smem>>) -> (i32, i32) {
    %c0_i32 = arith.constant 0 : i32
    %c0_i32_0 = arith.constant 0 : i32
    %c0_i32_1 = arith.constant 0 : i32
    return %c0_i32, %c0_i32_0 : i32, i32
  }
}

</mosaic_0001>

<llo_original>
// kernel: user_encoder_forward.1
$region0: #{user_encoder_forward.1}
  #allocation0 [shape = 'u32[]', space=smem, size = 0x4, offset = 0x4, fixed_abs, tag = 'smem constant byte address 0x4 - core index']
  #allocation1 [shape = 'u32[144,128]{1,0:T(1,128)}', space=vmem, size = 0x12000, scoped, tag = 'internal scratch']
  #allocation2 [shape = 'f32[16,32]{1,0:T(8,128)}', space=vmem, size = 0x2000, scoped, tag = 'scratch operand']
  #allocation3 [shape = 'f32[16,96]{1,0:T(8,128)}', space=vmem, size = 0x2000, scoped, tag = 'scratch operand']
  #allocation4 [shape = 's32[1]{0}', space=sflag, size = 0x4, scoped, tag = 'scoped memory for user_encoder_forward.1']
  #allocation5 [shape = 's32[1]{0:T(128)S(6)}', space=smem, size = 0x200, scoped, tag = 'prefetched SMEM operand 0']
  %s0 = inlined_call_operand.<no memory space> [shape: s32[1], index: 0, kind: input, shape index: {}]
  %s1 = inlined_call_operand.vmem [shape: bf16[16,10,16], index: 1, kind: input, shape index: {}]
  %s2 = inlined_call_operand.vmem [shape: bf16[48,32], index: 2, kind: input, shape index: {}]
  %s3 = inlined_call_operand.vmem [shape: f32[1,32], index: 3, kind: input, shape index: {}]
  %s4 = inlined_call_operand.vmem [shape: bf16[32,16], index: 4, kind: input, shape index: {}]
  %s5 = inlined_call_operand.vmem [shape: f32[1,16], index: 5, kind: input, shape index: {}]
  %s6 = inlined_call_operand.vmem [shape: f32[1,16], index: 6, kind: input, shape index: {}]
  %s7 = inlined_call_operand.vmem [shape: f32[1,32], index: 7, kind: input, shape index: {}]
  %s8 = inlined_call_operand.vmem [shape: f32[1,32], index: 8, kind: input, shape index: {}]
  %s9 = inlined_call_operand.vmem [shape: bf16[32,96], index: 9, kind: input, shape index: {}]
  %s10 = inlined_call_operand.vmem [shape: bf16[32,96], index: 10, kind: input, shape index: {}]
  %s11 = inlined_call_operand.vmem [shape: f32[1,96], index: 11, kind: input, shape index: {}]
  %s12 = inlined_call_operand.vmem [shape: f32[1,96], index: 12, kind: input, shape index: {}]
  %s13 = inlined_call_operand.hbm [shape: f32[1,32], index: 13, kind: output, shape index: {}]
  %s14 = sld [smem:[#allocation0]]
  $region69: #{user_encoder_forward.1} parent=0
    _
  %s16 = ssub.s32 1, %s14
  %s17 = scalar_select 0, %s16, %s14
  %18 = sst [smem:[#allocation5]] %s0
  $region1: #{user_encoder_forward.1} parent=0
    #allocation6 [shape = 'u8[512]{0}', space=vmem, size = 0x400, scoped, tag = 'output window, operand 0, single buffered']
    #allocation7 [shape = 's32[1]{0}', space=sflag, size = 0x4, scoped, tag = 'scoped memory for user_encoder_forward.1']
    %19 = vsyncpa [#allocation7], 0
    // Predicated region
    $region2: #{user_encoder_forward.1} parent=1 // pred_check
      _
    $region3: #{user_encoder_forward.1} parent=1 // pred_check_branch
      %21 = sbr.rel (0) target = $region5
    $region4: #{user_encoder_forward.1} parent=1 // pred_region
      _
    $region5: #{user_encoder_forward.1} parent=1 // pred_fallthru
      _
    // Predicated region
    $region6: #{user_encoder_forward.1} parent=1 // pred_check
      _
    $region7: #{user_encoder_forward.1} parent=1 // pred_check_branch
      %23 = sbr.rel (0) target = $region9
    $region8: #{user_encoder_forward.1} parent=1 // pred_region
      _
    $region9: #{user_encoder_forward.1} parent=1 // pred_fallthru
      _
    // Predicated region
    $region10: #{user_encoder_forward.1} parent=1 // pred_check
      _
    $region11: #{user_encoder_forward.1} parent=1 // pred_check_branch
      %25 = sbr.rel (0) target = $region13
    $region12: #{user_encoder_forward.1} parent=1 // pred_region
      _
    $region13: #{user_encoder_forward.1} parent=1 // pred_fallthru
      _
    // Predicated region
    $region14: #{user_encoder_forward.1} parent=1 // pred_check
      _
    $region15: #{user_encoder_forward.1} parent=1 // pred_check_branch
      %27 = sbr.rel (0) target = $region17
    $region16: #{user_encoder_forward.1} parent=1 // pred_region
      _
    $region17: #{user_encoder_forward.1} parent=1 // pred_fallthru
      _
    // Predicated region
    $region18: #{user_encoder_forward.1} parent=1 // pred_check
      _
    $region19: #{user_encoder_forward.1} parent=1 // pred_check_branch
      %29 = sbr.rel (0) target = $region21
    $region20: #{user_encoder_forward.1} parent=1 // pred_region
      _
    $region21: #{user_encoder_forward.1} parent=1 // pred_fallthru
      _
    // Predicated region
    $region22: #{user_encoder_forward.1} parent=1 // pred_check
      _
    $region23: #{user_encoder_forward.1} parent=1 // pred_check_branch
      %31 = sbr.rel (0) target = $region25
    $region24: #{user_encoder_forward.1} parent=1 // pred_region
      _
    $region25: #{user_encoder_forward.1} parent=1 // pred_fallthru
      _
    // Predicated region
    $region26: #{user_encoder_forward.1} parent=1 // pred_check
      _
    $region27: #{user_encoder_forward.1} parent=1 // pred_check_branch
      %33 = sbr.rel (0) target = $region29
    $region28: #{user_encoder_forward.1} parent=1 // pred_region
      _
    $region29: #{user_encoder_forward.1} parent=1 // pred_fallthru
      _
    // Predicated region
    $region30: #{user_encoder_forward.1} parent=1 // pred_check
      _
    $region31: #{user_encoder_forward.1} parent=1 // pred_check_branch
      %35 = sbr.rel (0) target = $region33
    $region32: #{user_encoder_forward.1} parent=1 // pred_region
      _
    $region33: #{user_encoder_forward.1} parent=1 // pred_fallthru
      _
    // Predicated region
    $region34: #{user_encoder_forward.1} parent=1 // pred_check
      _
    $region35: #{user_encoder_forward.1} parent=1 // pred_check_branch
      %37 = sbr.rel (0) target = $region37
    $region36: #{user_encoder_forward.1} parent=1 // pred_region
      _
    $region37: #{user_encoder_forward.1} parent=1 // pred_fallthru
      _
    // Predicated region
    $region38: #{user_encoder_forward.1} parent=1 // pred_check
      _
    $region39: #{user_encoder_forward.1} parent=1 // pred_check_branch
      %39 = sbr.rel (0) target = $region41
    $region40: #{user_encoder_forward.1} parent=1 // pred_region
      _
    $region41: #{user_encoder_forward.1} parent=1 // pred_fallthru
      _
    // Predicated region
    $region42: #{user_encoder_forward.1} parent=1 // pred_check
      _
    $region43: #{user_encoder_forward.1} parent=1 // pred_check_branch
      %41 = sbr.rel (0) target = $region45
    $region44: #{user_encoder_forward.1} parent=1 // pred_region
      _
    $region45: #{user_encoder_forward.1} parent=1 // pred_fallthru
      _
    // Predicated region
    $region46: #{user_encoder_forward.1} parent=1 // pred_check
      _
    $region47: #{user_encoder_forward.1} parent=1 // pred_check_branch
      %43 = sbr.rel (0) target = $region49
    $region48: #{user_encoder_forward.1} parent=1 // pred_region
      _
    $region49: #{user_encoder_forward.1} parent=1 // pred_fallthru
      _
    %v45 = vld [vmem:[%s1] sm:$0xf]
    %v46 = vld [vmem:[%s1 + $0x4] sm:$0x1]
    %v47 = vld [vmem:[%s1 + $0x8] sm:$0xf]
    %v48 = vld [vmem:[%s1 + $0xc] sm:$0x1]
    %v49 = vld [vmem:[%s1 + $0x10] sm:$0xf]
    %v50 = vld [vmem:[%s1 + $0x14] sm:$0x1]
    %v51 = vld [vmem:[%s1 + $0x18] sm:$0xf]
    %v52 = vld [vmem:[%s1 + $0x1c] sm:$0x1]
    %v53 = vld [vmem:[%s1 + $0x20] sm:$0xf]
    %v54 = vld [vmem:[%s1 + $0x24] sm:$0x1]
    %v55 = vld [vmem:[%s1 + $0x28] sm:$0xf]
    %v56 = vld [vmem:[%s1 + $0x2c] sm:$0x1]
    %v57 = vld [vmem:[%s1 + $0x30] sm:$0xf]
    %v58 = vld [vmem:[%s1 + $0x34] sm:$0x1]
    %v59 = vld [vmem:[%s1 + $0x38] sm:$0xf]
    %v60 = vld [vmem:[%s1 + $0x3c] sm:$0x1]
    %v61 = vld [vmem:[%s1 + $0x40] sm:$0xf]
    %v62 = vld [vmem:[%s1 + $0x44] sm:$0x1]
    %v63 = vld [vmem:[%s1 + $0x48] sm:$0xf]
    %v64 = vld [vmem:[%s1 + $0x4c] sm:$0x1]
    %v65 = vld [vmem:[%s1 + $0x50] sm:$0xf]
    %v66 = vld [vmem:[%s1 + $0x54] sm:$0x1]
    %v67 = vld [vmem:[%s1 + $0x58] sm:$0xf]
    %v68 = vld [vmem:[%s1 + $0x5c] sm:$0x1]
    %v69 = vld [vmem:[%s1 + $0x60] sm:$0xf]
    %v70 = vld [vmem:[%s1 + $0x64] sm:$0x1]
    %v71 = vld [vmem:[%s1 + $0x68] sm:$0xf]
    %v72 = vld [vmem:[%s1 + $0x6c] sm:$0x1]
    %v73 = vld [vmem:[%s1 + $0x70] sm:$0xf]
    %v74 = vld [vmem:[%s1 + $0x74] sm:$0x1]
    %v75 = vld [vmem:[%s1 + $0x78] sm:$0xf]
    %v76 = vld [vmem:[%s1 + $0x7c] sm:$0x1]
    %v109 = vunpack.c.l.b16 %v45
    %v110 = vunpack.c.l.b16 %v46
    %v111 = vunpack.c.l.b16 %v47
    %v112 = vunpack.c.l.b16 %v48
    %v113 = vunpack.c.l.b16 %v49
    %v114 = vunpack.c.l.b16 %v50
    %v115 = vunpack.c.l.b16 %v51
    %v116 = vunpack.c.l.b16 %v52
    %v117 = vunpack.c.l.b16 %v53
    %v118 = vunpack.c.l.b16 %v54
    %v119 = vunpack.c.l.b16 %v55
    %v120 = vunpack.c.l.b16 %v56
    %v121 = vunpack.c.l.b16 %v57
    %v122 = vunpack.c.l.b16 %v58
    %v123 = vunpack.c.l.b16 %v59
    %v124 = vunpack.c.l.b16 %v60
    %v125 = vunpack.c.l.b16 %v61
    %v126 = vunpack.c.l.b16 %v62
    %v127 = vunpack.c.l.b16 %v63
    %v128 = vunpack.c.l.b16 %v64
    %v129 = vunpack.c.l.b16 %v65
    %v130 = vunpack.c.l.b16 %v66
    %v131 = vunpack.c.l.b16 %v67
    %v132 = vunpack.c.l.b16 %v68
    %v133 = vunpack.c.l.b16 %v69
    %v134 = vunpack.c.l.b16 %v70
    %v135 = vunpack.c.l.b16 %v71
    %v136 = vunpack.c.l.b16 %v72
    %v137 = vunpack.c.l.b16 %v73
    %v138 = vunpack.c.l.b16 %v74
    %v139 = vunpack.c.l.b16 %v75
    %v140 = vunpack.c.l.b16 %v76
    %v141 = vpack.c.b16 %v110, %v109
    %v142 = vpack.c.b16 %v112, %v111
    %v143 = vpack.c.b16 %v114, %v113
    %v144 = vpack.c.b16 %v116, %v115
    %v145 = vpack.c.b16 %v118, %v117
    %v146 = vpack.c.b16 %v120, %v119
    %v147 = vpack.c.b16 %v122, %v121
    %v148 = vpack.c.b16 %v124, %v123
    %v149 = vpack.c.b16 %v126, %v125
    %v150 = vpack.c.b16 %v128, %v127
    %v151 = vpack.c.b16 %v130, %v129
    %v152 = vpack.c.b16 %v132, %v131
    %v153 = vpack.c.b16 %v134, %v133
    %v154 = vpack.c.b16 %v136, %v135
    %v155 = vpack.c.b16 %v138, %v137
    %v156 = vpack.c.b16 %v140, %v139
    %v158 = vshrl.u32 %v141, 16
    %v160 = vshll.u32 %v141, 16
    %v162 = vrot.slane %v160, 1
    %v163 = vor.u32 %v158, %v162
    %v165 = vshrl.u32 %v142, 16
    %v167 = vshll.u32 %v142, 16
    %v169 = vrot.slane %v167, 1
    %v170 = vor.u32 %v165, %v169
    %v172 = vshrl.u32 %v143, 16
    %v174 = vshll.u32 %v143, 16
    %v176 = vrot.slane %v174, 1
    %v177 = vor.u32 %v172, %v176
    %v179 = vshrl.u32 %v144, 16
    %v181 = vshll.u32 %v144, 16
    %v183 = vrot.slane %v181, 1
    %v184 = vor.u32 %v179, %v183
    %v186 = vshrl.u32 %v145, 16
    %v188 = vshll.u32 %v145, 16
    %v190 = vrot.slane %v188, 1
    %v191 = vor.u32 %v186, %v190
    %v193 = vshrl.u32 %v146, 16
    %v195 = vshll.u32 %v146, 16
    %v197 = vrot.slane %v195, 1
    %v198 = vor.u32 %v193, %v197
    %v200 = vshrl.u32 %v147, 16
    %v202 = vshll.u32 %v147, 16
    %v204 = vrot.slane %v202, 1
    %v205 = vor.u32 %v200, %v204
    %v207 = vshrl.u32 %v148, 16
    %v209 = vshll.u32 %v148, 16
    %v211 = vrot.slane %v209, 1
    %v212 = vor.u32 %v207, %v211
    %v214 = vshrl.u32 %v149, 16
    %v216 = vshll.u32 %v149, 16
    %v218 = vrot.slane %v216, 1
    %v219 = vor.u32 %v214, %v218
    %v221 = vshrl.u32 %v150, 16
    %v223 = vshll.u32 %v150, 16
    %v225 = vrot.slane %v223, 1
    %v226 = vor.u32 %v221, %v225
    %v228 = vshrl.u32 %v151, 16
    %v230 = vshll.u32 %v151, 16
    %v232 = vrot.slane %v230, 1
    %v233 = vor.u32 %v228, %v232
    %v235 = vshrl.u32 %v152, 16
    %v237 = vshll.u32 %v152, 16
    %v239 = vrot.slane %v237, 1
    %v240 = vor.u32 %v235, %v239
    %v242 = vshrl.u32 %v153, 16
    %v244 = vshll.u32 %v153, 16
    %v246 = vrot.slane %v244, 1
    %v247 = vor.u32 %v242, %v246
    %v249 = vshrl.u32 %v154, 16
    %v251 = vshll.u32 %v154, 16
    %v253 = vrot.slane %v251, 1
    %v254 = vor.u32 %v249, %v253
    %v256 = vshrl.u32 %v155, 16
    %v258 = vshll.u32 %v155, 16
    %v260 = vrot.slane %v258, 1
    %v261 = vor.u32 %v256, %v260
    %v263 = vshrl.u32 %v156, 16
    %v265 = vshll.u32 %v156, 16
    %v267 = vrot.slane %v265, 1
    %v268 = vor.u32 %v263, %v267
    %269 = vrot.lane.b32.xlu0 %v163, 16
    %v270 = vpop.permute.xlu0 %269
    %271 = vrot.lane.b32.xlu0 %v170, 16
    %v272 = vpop.permute.xlu0 %271
    %273 = vrot.lane.b32.xlu0 %v177, 16
    %v274 = vpop.permute.xlu0 %273
    %275 = vrot.lane.b32.xlu0 %v184, 16
    %v276 = vpop.permute.xlu0 %275
    %277 = vrot.lane.b32.xlu0 %v191, 16
    %v278 = vpop.permute.xlu0 %277
    %279 = vrot.lane.b32.xlu0 %v198, 16
    %v280 = vpop.permute.xlu0 %279
    %281 = vrot.lane.b32.xlu0 %v205, 16
    %v282 = vpop.permute.xlu0 %281
    %283 = vrot.lane.b32.xlu0 %v212, 16
    %v284 = vpop.permute.xlu0 %283
    %285 = vrot.lane.b32.xlu0 %v219, 16
    %v286 = vpop.permute.xlu0 %285
    %287 = vrot.lane.b32.xlu0 %v226, 16
    %v288 = vpop.permute.xlu0 %287
    %289 = vrot.lane.b32.xlu0 %v233, 16
    %v290 = vpop.permute.xlu0 %289
    %291 = vrot.lane.b32.xlu0 %v240, 16
    %v292 = vpop.permute.xlu0 %291
    %293 = vrot.lane.b32.xlu0 %v247, 16
    %v294 = vpop.permute.xlu0 %293
    %295 = vrot.lane.b32.xlu0 %v254, 16
    %v296 = vpop.permute.xlu0 %295
    %297 = vrot.lane.b32.xlu0 %v261, 16
    %v298 = vpop.permute.xlu0 %297
    %299 = vrot.lane.b32.xlu0 %v268, 16
    %v300 = vpop.permute.xlu0 %299
    %v301 = vrot.slane %v141, 1
    %v302 = vrot.slane %v142, 1
    %v303 = vrot.slane %v143, 1
    %v304 = vrot.slane %v144, 1
    %v305 = vrot.slane %v145, 1
    %v306 = vrot.slane %v146, 1
    %v307 = vrot.slane %v147, 1
    %v308 = vrot.slane %v148, 1
    %v309 = vrot.slane %v149, 1
    %v310 = vrot.slane %v150, 1
    %v311 = vrot.slane %v151, 1
    %v312 = vrot.slane %v152, 1
    %v313 = vrot.slane %v153, 1
    %v314 = vrot.slane %v154, 1
    %v315 = vrot.slane %v155, 1
    %v316 = vrot.slane %v156, 1
    %317 = vrot.lane.b32.xlu0 %v301, 32
    %v318 = vpop.permute.xlu0 %317
    %319 = vrot.lane.b32.xlu0 %v302, 32
    %v320 = vpop.permute.xlu0 %319
    %321 = vrot.lane.b32.xlu0 %v303, 32
    %v322 = vpop.permute.xlu0 %321
    %323 = vrot.lane.b32.xlu0 %v304, 32
    %v324 = vpop.permute.xlu0 %323
    %325 = vrot.lane.b32.xlu0 %v305, 32
    %v326 = vpop.permute.xlu0 %325
    %327 = vrot.lane.b32.xlu0 %v306, 32
    %v328 = vpop.permute.xlu0 %327
    %329 = vrot.lane.b32.xlu0 %v307, 32
    %v330 = vpop.permute.xlu0 %329
    %331 = vrot.lane.b32.xlu0 %v308, 32
    %v332 = vpop.permute.xlu0 %331
    %333 = vrot.lane.b32.xlu0 %v309, 32
    %v334 = vpop.permute.xlu0 %333
    %335 = vrot.lane.b32.xlu0 %v310, 32
    %v336 = vpop.permute.xlu0 %335
    %337 = vrot.lane.b32.xlu0 %v311, 32
    %v338 = vpop.permute.xlu0 %337
    %339 = vrot.lane.b32.xlu0 %v312, 32
    %v340 = vpop.permute.xlu0 %339
    %341 = vrot.lane.b32.xlu0 %v313, 32
    %v342 = vpop.permute.xlu0 %341
    %343 = vrot.lane.b32.xlu0 %v314, 32
    %v344 = vpop.permute.xlu0 %343
    %345 = vrot.lane.b32.xlu0 %v315, 32
    %v346 = vpop.permute.xlu0 %345
    %347 = vrot.lane.b32.xlu0 %v316, 32
    %v348 = vpop.permute.xlu0 %347
    %vm349 = vcmask 130048
    %v352 = vsel %vm349, %v45, %v270
    %v355 = vsel %vm349, %v47, %v272
    %v358 = vsel %vm349, %v49, %v274
    %v361 = vsel %vm349, %v51, %v276
    %v364 = vsel %vm349, %v53, %v278
    %v367 = vsel %vm349, %v55, %v280
    %v370 = vsel %vm349, %v57, %v282
    %v373 = vsel %vm349, %v59, %v284
    %v376 = vsel %vm349, %v61, %v286
    %v379 = vsel %vm349, %v63, %v288
    %v382 = vsel %vm349, %v65, %v290
    %v385 = vsel %vm349, %v67, %v292
    %v388 = vsel %vm349, %v69, %v294
    %v391 = vsel %vm349, %v71, %v296
    %v394 = vsel %vm349, %v73, %v298
    %v397 = vsel %vm349, %v75, %v300
    %vm398 = vcmask 261120
    %v400 = vsel %vm398, %v352, %v318
    %v402 = vsel %vm398, %v355, %v320
    %v404 = vsel %vm398, %v358, %v322
    %v406 = vsel %vm398, %v361, %v324
    %v408 = vsel %vm398, %v364, %v326
    %v410 = vsel %vm398, %v367, %v328
    %v412 = vsel %vm398, %v370, %v330
    %v414 = vsel %vm398, %v373, %v332
    %v416 = vsel %vm398, %v376, %v334
    %v418 = vsel %vm398, %v379, %v336
    %v420 = vsel %vm398, %v382, %v338
    %v422 = vsel %vm398, %v385, %v340
    %v424 = vsel %vm398, %v388, %v342
    %v426 = vsel %vm398, %v391, %v344
    %v428 = vsel %vm398, %v394, %v346
    %v430 = vsel %vm398, %v397, %v348
    %v431 = vld [vmem:[%s2] sm:$0xf]
    %v432 = vld [vmem:[%s2 + $0x4] sm:$0xf]
    %v433 = vld [vmem:[%s2 + $0x8] sm:$0xf]
    %v434 = vld [vmem:[%s2 + $0xc] sm:$0xf]
    %v435 = vld [vmem:[%s2 + $0x10] sm:$0xf]
    %v436 = vld [vmem:[%s2 + $0x14] sm:$0xf]
    %v437 = vld [vmem:[%s3] sm:$0x1]
    %v439 = vlaneseq
    %v440 = vshrl.u32 %v439, 7
    %v441 = vsub.s32 0, %v440
    %v442 = vrot.slane %v437, %v441
    %v460 = vunpack.c.l.b16 %v400
    %v461 = vunpack.c.l.b16 %v402
    %v462 = vunpack.c.l.b16 %v404
    %v463 = vunpack.c.l.b16 %v406
    %v464 = vunpack.c.l.b16 %v408
    %v465 = vunpack.c.l.b16 %v410
    %v466 = vunpack.c.l.b16 %v412
    %v467 = vunpack.c.l.b16 %v414
    %v468 = vunpack.c.l.b16 %v416
    %v469 = vunpack.c.l.b16 %v418
    %v470 = vunpack.c.l.b16 %v420
    %v471 = vunpack.c.l.b16 %v422
    %v472 = vunpack.c.l.b16 %v424
    %v473 = vunpack.c.l.b16 %v426
    %v474 = vunpack.c.l.b16 %v428
    %v475 = vunpack.c.l.b16 %v430
    %v476 = vpack.c.b16 %v461, %v460
    %v477 = vpack.c.b16 %v463, %v462
    %v478 = vpack.c.b16 %v465, %v464
    %v479 = vpack.c.b16 %v467, %v466
    %v480 = vpack.c.b16 %v469, %v468
    %v481 = vpack.c.b16 %v471, %v470
    %v482 = vpack.c.b16 %v473, %v472
    %v483 = vpack.c.b16 %v475, %v474
    %v490 = vunpack.c.l.b16 %v431
    %v491 = vunpack.c.l.b16 %v432
    %v492 = vunpack.c.l.b16 %v433
    %v493 = vunpack.c.l.b16 %v434
    %v494 = vunpack.c.l.b16 %v435
    %v495 = vunpack.c.l.b16 %v436
    %v496 = vpack.c.b16 %v491, %v490
    %v497 = vpack.c.b16 %v493, %v492
    %v498 = vpack.c.b16 %v495, %v494
    %vm502 = vcmask 392192
    %v504 = vsel %vm502, %v476, 0
    %v507 = vsel %vm502, %v477, 0
    %v510 = vsel %vm502, %v478, 0
    %v513 = vsel %vm502, %v479, 0
    %v516 = vsel %vm502, %v480, 0
    %v519 = vsel %vm502, %v481, 0
    %v522 = vsel %vm502, %v482, 0
    %v525 = vsel %vm502, %v483, 0
    %527 = vmatprep.subr.bf16.mxu0 0
    %528 = vmatpush1.bf16.msra.mxu0 %v496
    %529 = vmatprep.subr.bf16.mxu0 0
    %530 = vmatpush1.bf16.msra.mxu0 %v497
    %531 = vmatprep.subr.bf16.mxu0 0
    %532 = vmatpush1.bf16.msra.mxu0 %v498
    %533 = vmatprep.subr.bf16.mxu0 0
    %534 = vmatpush1.bf16.msra.mxu0 0
    %535 = vmatprep.subr.bf16.mxu0 0
    %536 = vmatpush1.bf16.msra.mxu0 0
    %537 = vmatprep.subr.bf16.mxu0 0
    %538 = vmatpush1.bf16.msra.mxu0 0
    %539 = vmatprep.subr.bf16.mxu0 0
    %540 = vmatpush1.bf16.msra.mxu0 0
    %541 = vmatprep.subr.bf16.mxu0 0
    %542 = vmatpush1.bf16.msra.mxu0 0
    %543 = vmatprep.subr.bf16.mxu0 0
    %544 = vmatpush1.bf16.msra.mxu0 0
    %545 = vmatprep.subr.bf16.mxu0 0
    %546 = vmatpush1.bf16.msra.mxu0 0
    %547 = vmatprep.subr.bf16.mxu0 0
    %548 = vmatpush1.bf16.msra.mxu0 0
    %549 = vmatprep.subr.bf16.mxu0 0
    %550 = vmatpush1.bf16.msra.mxu0 0
    %551 = vmatprep.subr.bf16.mxu0 0
    %552 = vmatpush1.bf16.msra.mxu0 0
    %553 = vmatprep.subr.bf16.mxu0 0
    %554 = vmatpush1.bf16.msra.mxu0 0
    %555 = vmatprep.subr.bf16.mxu0 0
    %556 = vmatpush1.bf16.msra.mxu0 0
    %557 = vmatprep.subr.bf16.mxu0 0
    %558 = vmatpush1.bf16.msra.mxu0 0
    %559 = vmatprep.mubr.bf16.mxu0 0
    %560 = vmatmul.mubr.bf16.gmra.mrb[0].mxu0 %v504
    %v561 = vpop.f32.mrb[0].mxu0
    %v562 = vadd.f32 %v442, %v561
    %v563 = vpop.f32.mrb[0].mxu0
    %v564 = vpop.f32.mrb[0].mxu0
    %v565 = vadd.f32 %v442, %v564
    %v566 = vpop.f32.mrb[0].mxu0
    %567 = vmatprep.mubr.bf16.mxu0 0
    %568 = vmatmul.mubr.bf16.gmra.mrb[0].mxu0 %v507
    %v569 = vpop.f32.mrb[0].mxu0
    %v570 = vadd.f32 %v442, %v569
    %v571 = vpop.f32.mrb[0].mxu0
    %v572 = vpop.f32.mrb[0].mxu0
    %v573 = vadd.f32 %v442, %v572
    %v574 = vpop.f32.mrb[0].mxu0
    %575 = vmatprep.mubr.bf16.mxu0 0
    %576 = vmatmul.mubr.bf16.gmra.mrb[0].mxu0 %v510
    %v577 = vpop.f32.mrb[0].mxu0
    %v578 = vadd.f32 %v442, %v577
    %v579 = vpop.f32.mrb[0].mxu0
    %v580 = vpop.f32.mrb[0].mxu0
    %v581 = vadd.f32 %v442, %v580
    %v582 = vpop.f32.mrb[0].mxu0
    %583 = vmatprep.mubr.bf16.mxu0 0
    %584 = vmatmul.mubr.bf16.gmra.mrb[0].mxu0 %v513
    %v585 = vpop.f32.mrb[0].mxu0
    %v586 = vadd.f32 %v442, %v585
    %v587 = vpop.f32.mrb[0].mxu0
    %v588 = vpop.f32.mrb[0].mxu0
    %v589 = vadd.f32 %v442, %v588
    %v590 = vpop.f32.mrb[0].mxu0
    %591 = vmatprep.mubr.bf16.mxu0 0
    %592 = vmatmul.mubr.bf16.gmra.mrb[0].mxu0 %v516
    %v593 = vpop.f32.mrb[0].mxu0
    %v594 = vadd.f32 %v442, %v593
    %v595 = vpop.f32.mrb[0].mxu0
    %v596 = vpop.f32.mrb[0].mxu0
    %v597 = vadd.f32 %v442, %v596
    %v598 = vpop.f32.mrb[0].mxu0
    %599 = vmatprep.mubr.bf16.mxu0 0
    %600 = vmatmul.mubr.bf16.gmra.mrb[0].mxu0 %v519
    %v601 = vpop.f32.mrb[0].mxu0
    %v602 = vadd.f32 %v442, %v601
    %v603 = vpop.f32.mrb[0].mxu0
    %v604 = vpop.f32.mrb[0].mxu0
    %v605 = vadd.f32 %v442, %v604
    %v606 = vpop.f32.mrb[0].mxu0
    %607 = vmatprep.mubr.bf16.mxu0 0
    %608 = vmatmul.mubr.bf16.gmra.mrb[0].mxu0 %v522
    %v609 = vpop.f32.mrb[0].mxu0
    %v610 = vadd.f32 %v442, %v609
    %v611 = vpop.f32.mrb[0].mxu0
    %v612 = vpop.f32.mrb[0].mxu0
    %v613 = vadd.f32 %v442, %v612
    %v614 = vpop.f32.mrb[0].mxu0
    %615 = vmatprep.mubr.bf16.mxu0 0
    %616 = vmatmul.mubr.bf16.gmra.mrb[0].mxu0 %v525
    %v617 = vpop.f32.mrb[0].mxu0
    %v618 = vadd.f32 %v442, %v617
    %v619 = vpop.f32.mrb[0].mxu0
    %v620 = vpop.f32.mrb[0].mxu0
    %v621 = vadd.f32 %v442, %v620
    %v622 = vpop.f32.mrb[0].mxu0
    %623 = vdwg.mxu0
    %v624 = vmax.f32 %v562, 0.0
    %v625 = vmax.f32 %v565, 0.0
    %v626 = vmax.f32 %v570, 0.0
    %v627 = vmax.f32 %v573, 0.0
    %v628 = vmax.f32 %v578, 0.0
    %v629 = vmax.f32 %v581, 0.0
    %v630 = vmax.f32 %v586, 0.0
    %v631 = vmax.f32 %v589, 0.0
    %v632 = vmax.f32 %v594, 0.0
    %v633 = vmax.f32 %v597, 0.0
    %v634 = vmax.f32 %v602, 0.0
    %v635 = vmax.f32 %v605, 0.0
    %v636 = vmax.f32 %v610, 0.0
    %v637 = vmax.f32 %v613, 0.0
    %v638 = vmax.f32 %v618, 0.0
    %v639 = vmax.f32 %v621, 0.0
    %v640 = vpack.c.bf16 %v625, %v624
    %v641 = vpack.c.bf16 %v627, %v626
    %v642 = vpack.c.bf16 %v629, %v628
    %v643 = vpack.c.bf16 %v631, %v630
    %v644 = vpack.c.bf16 %v633, %v632
    %v645 = vpack.c.bf16 %v635, %v634
    %v646 = vpack.c.bf16 %v637, %v636
    %v647 = vpack.c.bf16 %v639, %v638
    %v648 = vld [vmem:[%s4] sm:$0xf]
    %v649 = vld [vmem:[%s4 + $0x4] sm:$0xf]
    %v650 = vld [vmem:[%s4 + $0x8] sm:$0xf]
    %v651 = vld [vmem:[%s4 + $0xc] sm:$0xf]
    %v652 = vld [vmem:[%s5] sm:$0x1]
    %v654 = vlaneseq
    %v655 = vshrl.u32 %v654, 7
    %v656 = vsub.s32 0, %v655
    %v657 = vrot.slane %v652, %v656
    %v663 = vunpack.c.l.b16 %v648
    %v664 = vunpack.c.l.b16 %v649
    %v665 = vunpack.c.l.b16 %v650
    %v666 = vunpack.c.l.b16 %v651
    %v667 = vpack.c.b16 %v664, %v663
    %v668 = vpack.c.b16 %v666, %v665
    %v672 = vsel %vm398, %v640, 0
    %v675 = vsel %vm398, %v641, 0
    %v678 = vsel %vm398, %v642, 0
    %v681 = vsel %vm398, %v643, 0
    %v684 = vsel %vm398, %v644, 0
    %v687 = vsel %vm398, %v645, 0
    %v690 = vsel %vm398, %v646, 0
    %v693 = vsel %vm398, %v647, 0
    %695 = vmatprep.subr.bf16.mxu0 0
    %696 = vmatpush1.bf16.msra.mxu0 %v667
    %697 = vmatprep.subr.bf16.mxu0 0
    %698 = vmatpush1.bf16.msra.mxu0 %v668
    %699 = vmatprep.subr.bf16.mxu0 0
    %700 = vmatpush1.bf16.msra.mxu0 0
    %701 = vmatprep.subr.bf16.mxu0 0
    %702 = vmatpush1.bf16.msra.mxu0 0
    %703 = vmatprep.subr.bf16.mxu0 0
    %704 = vmatpush1.bf16.msra.mxu0 0
    %705 = vmatprep.subr.bf16.mxu0 0
    %706 = vmatpush1.bf16.msra.mxu0 0
    %707 = vmatprep.subr.bf16.mxu0 0
    %708 = vmatpush1.bf16.msra.mxu0 0
    %709 = vmatprep.subr.bf16.mxu0 0
    %710 = vmatpush1.bf16.msra.mxu0 0
    %711 = vmatprep.subr.bf16.mxu0 0
    %712 = vmatpush1.bf16.msra.mxu0 0
    %713 = vmatprep.subr.bf16.mxu0 0
    %714 = vmatpush1.bf16.msra.mxu0 0
    %715 = vmatprep.subr.bf16.mxu0 0
    %716 = vmatpush1.bf16.msra.mxu0 0
    %717 = vmatprep.subr.bf16.mxu0 0
    %718 = vmatpush1.bf16.msra.mxu0 0
    %719 = vmatprep.subr.bf16.mxu0 0
    %720 = vmatpush1.bf16.msra.mxu0 0
    %721 = vmatprep.subr.bf16.mxu0 0
    %722 = vmatpush1.bf16.msra.mxu0 0
    %723 = vmatprep.subr.bf16.mxu0 0
    %724 = vmatpush1.bf16.msra.mxu0 0
    %725 = vmatprep.subr.bf16.mxu0 0
    %726 = vmatpush1.bf16.msra.mxu0 0
    %727 = vmatprep.mubr.bf16.mxu0 0
    %728 = vmatmul.mubr.bf16.gmra.mrb[0].mxu0 %v672
    %v729 = vpop.f32.mrb[0].mxu0
    %v730 = vadd.f32 %v657, %v729
    %v731 = vpop.f32.mrb[0].mxu0
    %v732 = vpop.f32.mrb[0].mxu0
    %v733 = vadd.f32 %v657, %v732
    %v734 = vpop.f32.mrb[0].mxu0
    %735 = vmatprep.mubr.bf16.mxu0 0
    %736 = vmatmul.mubr.bf16.gmra.mrb[0].mxu0 %v675
    %v737 = vpop.f32.mrb[0].mxu0
    %v738 = vadd.f32 %v657, %v737
    %v739 = vpop.f32.mrb[0].mxu0
    %v740 = vpop.f32.mrb[0].mxu0
    %v741 = vadd.f32 %v657, %v740
    %v742 = vpop.f32.mrb[0].mxu0
    %743 = vmatprep.mubr.bf16.mxu0 0
    %744 = vmatmul.mubr.bf16.gmra.mrb[0].mxu0 %v678
    %v745 = vpop.f32.mrb[0].mxu0
    %v746 = vadd.f32 %v657, %v745
    %v747 = vpop.f32.mrb[0].mxu0
    %v748 = vpop.f32.mrb[0].mxu0
    %v749 = vadd.f32 %v657, %v748
    %v750 = vpop.f32.mrb[0].mxu0
    %751 = vmatprep.mubr.bf16.mxu0 0
    %752 = vmatmul.mubr.bf16.gmra.mrb[0].mxu0 %v681
    %v753 = vpop.f32.mrb[0].mxu0
    %v754 = vadd.f32 %v657, %v753
    %v755 = vpop.f32.mrb[0].mxu0
    %v756 = vpop.f32.mrb[0].mxu0
    %v757 = vadd.f32 %v657, %v756
    %v758 = vpop.f32.mrb[0].mxu0
    %759 = vmatprep.mubr.bf16.mxu0 0
    %760 = vmatmul.mubr.bf16.gmra.mrb[0].mxu0 %v684
    %v761 = vpop.f32.mrb[0].mxu0
    %v762 = vadd.f32 %v657, %v761
    %v763 = vpop.f32.mrb[0].mxu0
    %v764 = vpop.f32.mrb[0].mxu0
    %v765 = vadd.f32 %v657, %v764
    %v766 = vpop.f32.mrb[0].mxu0
    %767 = vmatprep.mubr.bf16.mxu0 0
    %768 = vmatmul.mubr.bf16.gmra.mrb[0].mxu0 %v687
    %v769 = vpop.f32.mrb[0].mxu0
    %v770 = vadd.f32 %v657, %v769
    %v771 = vpop.f32.mrb[0].mxu0
    %v772 = vpop.f32.mrb[0].mxu0
    %v773 = vadd.f32 %v657, %v772
    %v774 = vpop.f32.mrb[0].mxu0
    %775 = vmatprep.mubr.bf16.mxu0 0
    %776 = vmatmul.mubr.bf16.gmra.mrb[0].mxu0 %v690
    %v777 = vpop.f32.mrb[0].mxu0
    %v778 = vadd.f32 %v657, %v777
    %v779 = vpop.f32.mrb[0].mxu0
    %v780 = vpop.f32.mrb[0].mxu0
    %v781 = vadd.f32 %v657, %v780
    %v782 = vpop.f32.mrb[0].mxu0
    %783 = vmatprep.mubr.bf16.mxu0 0
    %784 = vmatmul.mubr.bf16.gmra.mrb[0].mxu0 %v693
    %v785 = vpop.f32.mrb[0].mxu0
    %v786 = vadd.f32 %v657, %v785
    %v787 = vpop.f32.mrb[0].mxu0
    %v788 = vpop.f32.mrb[0].mxu0
    %v789 = vadd.f32 %v657, %v788
    %v790 = vpop.f32.mrb[0].mxu0
    %791 = vdwg.mxu0
    %v792 = vtanh.pop %v730
    %v793 = vtanh.pop %v733
    %v794 = vtanh.pop %v738
    %v795 = vtanh.pop %v741
    %v796 = vtanh.pop %v746
    %v797 = vtanh.pop %v749
    %v798 = vtanh.pop %v754
    %v799 = vtanh.pop %v757
    %v800 = vtanh.pop %v762
    %v801 = vtanh.pop %v765
    %v802 = vtanh.pop %v770
    %v803 = vtanh.pop %v773
    %v804 = vtanh.pop %v778
    %v805 = vtanh.pop %v781
    %v806 = vtanh.pop %v786
    %v807 = vtanh.pop %v789
    %v808 = vld [vmem:[%s6] sm:$0x1]
    %v810 = vlaneseq
    %v811 = vshrl.u32 %v810, 7
    %v812 = vsub.s32 0, %v811
    %v813 = vrot.slane %v808, %v812
    %v815 = vmul.f32 %v792, %v813
    %v816 = vmul.f32 %v793, %v813
    %v817 = vmul.f32 %v794, %v813
    %v818 = vmul.f32 %v795, %v813
    %v819 = vmul.f32 %v796, %v813
    %v820 = vmul.f32 %v797, %v813
    %v821 = vmul.f32 %v798, %v813
    %v822 = vmul.f32 %v799, %v813
    %v823 = vmul.f32 %v800, %v813
    %v824 = vmul.f32 %v801, %v813
    %v825 = vmul.f32 %v802, %v813
    %v826 = vmul.f32 %v803, %v813
    %v827 = vmul.f32 %v804, %v813
    %v828 = vmul.f32 %v805, %v813
    %v829 = vmul.f32 %v806, %v813
    %v830 = vmul.f32 %v807, %v813
    %v831 = vsel %vm349, %v815, 0.0
    %832 = vadd.xlane.f32.xlu0 %v831
    %v833 = vpop.xlane.xlu0 %832
    %v834 = vsel %vm349, %v816, 0.0
    %835 = vadd.xlane.f32.xlu0 %v834
    %v836 = vpop.xlane.xlu0 %835
    %v837 = vsel %vm349, %v817, 0.0
    %838 = vadd.xlane.f32.xlu0 %v837
    %v839 = vpop.xlane.xlu0 %838
    %v840 = vsel %vm349, %v818, 0.0
    %841 = vadd.xlane.f32.xlu0 %v840
    %v842 = vpop.xlane.xlu0 %841
    %v843 = vsel %vm349, %v819, 0.0
    %844 = vadd.xlane.f32.xlu0 %v843
    %v845 = vpop.xlane.xlu0 %844
    %v846 = vsel %vm349, %v820, 0.0
    %847 = vadd.xlane.f32.xlu0 %v846
    %v848 = vpop.xlane.xlu0 %847
    %v849 = vsel %vm349, %v821, 0.0
    %850 = vadd.xlane.f32.xlu0 %v849
    %v851 = vpop.xlane.xlu0 %850
    %v852 = vsel %vm349, %v822, 0.0
    %853 = vadd.xlane.f32.xlu0 %v852
    %v854 = vpop.xlane.xlu0 %853
    %v855 = vsel %vm349, %v823, 0.0
    %856 = vadd.xlane.f32.xlu0 %v855
    %v857 = vpop.xlane.xlu0 %856
    %v858 = vsel %vm349, %v824, 0.0
    %859 = vadd.xlane.f32.xlu0 %v858
    %v860 = vpop.xlane.xlu0 %859
    %v861 = vsel %vm349, %v825, 0.0
    %862 = vadd.xlane.f32.xlu0 %v861
    %v863 = vpop.xlane.xlu0 %862
    %v864 = vsel %vm349, %v826, 0.0
    %865 = vadd.xlane.f32.xlu0 %v864
    %v866 = vpop.xlane.xlu0 %865
    %v867 = vsel %vm349, %v827, 0.0
    %868 = vadd.xlane.f32.xlu0 %v867
    %v869 = vpop.xlane.xlu0 %868
    %v870 = vsel %vm349, %v828, 0.0
    %871 = vadd.xlane.f32.xlu0 %v870
    %v872 = vpop.xlane.xlu0 %871
    %v873 = vsel %vm349, %v829, 0.0
    %874 = vadd.xlane.f32.xlu0 %v873
    %v875 = vpop.xlane.xlu0 %874
    %v876 = vsel %vm349, %v830, 0.0
    %877 = vadd.xlane.f32.xlu0 %v876
    %v878 = vpop.xlane.xlu0 %877
    %v895 = vlaneseq
    %v896 = vand.u32 %v895, 127
    %v897 = vlaneseq
    %v898 = vshrl.u32 %v897, 7
    %v899 = vsub.s32 %v896, %v898
    %v900 = vrot.slane %v833, %v899
    %v901 = vlaneseq
    %v902 = vshrl.u32 %v901, 7
    %v903 = vsub.s32 %v896, %v902
    %v904 = vrot.slane %v836, %v903
    %v905 = vlaneseq
    %v906 = vshrl.u32 %v905, 7
    %v907 = vsub.s32 %v896, %v906
    %v908 = vrot.slane %v839, %v907
    %v909 = vlaneseq
    %v910 = vshrl.u32 %v909, 7
    %v911 = vsub.s32 %v896, %v910
    %v912 = vrot.slane %v842, %v911
    %v913 = vlaneseq
    %v914 = vshrl.u32 %v913, 7
    %v915 = vsub.s32 %v896, %v914
    %v916 = vrot.slane %v845, %v915
    %v917 = vlaneseq
    %v918 = vshrl.u32 %v917, 7
    %v919 = vsub.s32 %v896, %v918
    %v920 = vrot.slane %v848, %v919
    %v921 = vlaneseq
    %v922 = vshrl.u32 %v921, 7
    %v923 = vsub.s32 %v896, %v922
    %v924 = vrot.slane %v851, %v923
    %v925 = vlaneseq
    %v926 = vshrl.u32 %v925, 7
    %v927 = vsub.s32 %v896, %v926
    %v928 = vrot.slane %v854, %v927
    %v929 = vlaneseq
    %v930 = vshrl.u32 %v929, 7
    %v931 = vsub.s32 %v896, %v930
    %v932 = vrot.slane %v857, %v931
    %v933 = vlaneseq
    %v934 = vshrl.u32 %v933, 7
    %v935 = vsub.s32 %v896, %v934
    %v936 = vrot.slane %v860, %v935
    %v937 = vlaneseq
    %v938 = vshrl.u32 %v937, 7
    %v939 = vsub.s32 %v896, %v938
    %v940 = vrot.slane %v863, %v939
    %v941 = vlaneseq
    %v942 = vshrl.u32 %v941, 7
    %v943 = vsub.s32 %v896, %v942
    %v944 = vrot.slane %v866, %v943
    %v945 = vlaneseq
    %v946 = vshrl.u32 %v945, 7
    %v947 = vsub.s32 %v896, %v946
    %v948 = vrot.slane %v869, %v947
    %v949 = vlaneseq
    %v950 = vshrl.u32 %v949, 7
    %v951 = vsub.s32 %v896, %v950
    %v952 = vrot.slane %v872, %v951
    %v953 = vlaneseq
    %v954 = vshrl.u32 %v953, 7
    %v955 = vsub.s32 %v896, %v954
    %v956 = vrot.slane %v875, %v955
    %v957 = vlaneseq
    %v958 = vshrl.u32 %v957, 7
    %v959 = vsub.s32 %v896, %v958
    %v960 = vrot.slane %v878, %v959
    %vm961 = vcmask 1041409
    %v962 = vsel %vm961, %v904, %v900
    %vm963 = vcmask 1042434
    %v964 = vsel %vm963, %v908, %v962
    %vm965 = vcmask 1043459
    %v966 = vsel %vm965, %v912, %v964
    %vm967 = vcmask 1044484
    %v968 = vsel %vm967, %v916, %v966
    %vm969 = vcmask 1045509
    %v970 = vsel %vm969, %v920, %v968
    %vm971 = vcmask 1046534
    %v972 = vsel %vm971, %v924, %v970
    %vm973 = vcmask 1047559
    %v974 = vsel %vm973, %v928, %v972
    %v975 = vsel %vm961, %v936, %v932
    %v976 = vsel %vm963, %v940, %v975
    %v977 = vsel %vm965, %v944, %v976
    %v978 = vsel %vm967, %v948, %v977
    %v979 = vsel %vm969, %v952, %v978
    %v980 = vsel %vm971, %v956, %v979
    %v981 = vsel %vm973, %v960, %v980
    %vm984 = vcmask 64512
    %v985 = vsel %vm984, %v974, -inf
    %986 = vmax.xlane.f32.xlu0 %v985
    %v987 = vpop.xlane.xlu0 %986
    %v988 = vsel %vm984, %v981, -inf
    %989 = vmax.xlane.f32.xlu0 %v988
    %v990 = vpop.xlane.xlu0 %989
    %v993 = vlaneseq
    %v994 = vshrl.u32 %v993, 7
    %v995 = vsub.s32 0, %v994
    %v996 = vrot.slane %v987, %v995
    %v997 = vlaneseq
    %v998 = vshrl.u32 %v997, 7
    %v999 = vsub.s32 1, %v998
    %v1000 = vrot.slane %v987, %v999
    %v1001 = vlaneseq
    %v1002 = vshrl.u32 %v1001, 7
    %v1003 = vsub.s32 2, %v1002
    %v1004 = vrot.slane %v987, %v1003
    %v1005 = vlaneseq
    %v1006 = vshrl.u32 %v1005, 7
    %v1007 = vsub.s32 3, %v1006
    %v1008 = vrot.slane %v987, %v1007
    %v1009 = vlaneseq
    %v1010 = vshrl.u32 %v1009, 7
    %v1011 = vsub.s32 4, %v1010
    %v1012 = vrot.slane %v987, %v1011
    %v1013 = vlaneseq
    %v1014 = vshrl.u32 %v1013, 7
    %v1015 = vsub.s32 5, %v1014
    %v1016 = vrot.slane %v987, %v1015
    %v1017 = vlaneseq
    %v1018 = vshrl.u32 %v1017, 7
    %v1019 = vsub.s32 6, %v1018
    %v1020 = vrot.slane %v987, %v1019
    %v1021 = vlaneseq
    %v1022 = vshrl.u32 %v1021, 7
    %v1023 = vsub.s32 7, %v1022
    %v1024 = vrot.slane %v987, %v1023
    %v1025 = vlaneseq
    %v1026 = vshrl.u32 %v1025, 7
    %v1027 = vsub.s32 0, %v1026
    %v1028 = vrot.slane %v990, %v1027
    %v1029 = vlaneseq
    %v1030 = vshrl.u32 %v1029, 7
    %v1031 = vsub.s32 1, %v1030
    %v1032 = vrot.slane %v990, %v1031
    %v1033 = vlaneseq
    %v1034 = vshrl.u32 %v1033, 7
    %v1035 = vsub.s32 2, %v1034
    %v1036 = vrot.slane %v990, %v1035
    %v1037 = vlaneseq
    %v1038 = vshrl.u32 %v1037, 7
    %v1039 = vsub.s32 3, %v1038
    %v1040 = vrot.slane %v990, %v1039
    %v1041 = vlaneseq
    %v1042 = vshrl.u32 %v1041, 7
    %v1043 = vsub.s32 4, %v1042
    %v1044 = vrot.slane %v990, %v1043
    %v1045 = vlaneseq
    %v1046 = vshrl.u32 %v1045, 7
    %v1047 = vsub.s32 5, %v1046
    %v1048 = vrot.slane %v990, %v1047
    %v1049 = vlaneseq
    %v1050 = vshrl.u32 %v1049, 7
    %v1051 = vsub.s32 6, %v1050
    %v1052 = vrot.slane %v990, %v1051
    %v1053 = vlaneseq
    %v1054 = vshrl.u32 %v1053, 7
    %v1055 = vsub.s32 7, %v1054
    %v1056 = vrot.slane %v990, %v1055
    %v1073 = vsub.f32 %v833, %v996
    %v1074 = vsub.f32 %v836, %v1000
    %v1075 = vsub.f32 %v839, %v1004
    %v1076 = vsub.f32 %v842, %v1008
    %v1077 = vsub.f32 %v845, %v1012
    %v1078 = vsub.f32 %v848, %v1016
    %v1079 = vsub.f32 %v851, %v1020
    %v1080 = vsub.f32 %v854, %v1024
    %v1081 = vsub.f32 %v857, %v1028
    %v1082 = vsub.f32 %v860, %v1032
    %v1083 = vsub.f32 %v863, %v1036
    %v1084 = vsub.f32 %v866, %v1040
    %v1085 = vsub.f32 %v869, %v1044
    %v1086 = vsub.f32 %v872, %v1048
    %v1087 = vsub.f32 %v875, %v1052
    %v1088 = vsub.f32 %v878, %v1056
    %v1089 = vmul.f32 %v1073, 1.442695
    %v1090 = vpow.pop %v1089
    %v1091 = vmul.f32 %v1074, 1.442695
    %v1092 = vpow.pop %v1091
    %v1093 = vmul.f32 %v1075, 1.442695
    %v1094 = vpow.pop %v1093
    %v1095 = vmul.f32 %v1076, 1.442695
    %v1096 = vpow.pop %v1095
    %v1097 = vmul.f32 %v1077, 1.442695
    %v1098 = vpow.pop %v1097
    %v1099 = vmul.f32 %v1078, 1.442695
    %v1100 = vpow.pop %v1099
    %v1101 = vmul.f32 %v1079, 1.442695
    %v1102 = vpow.pop %v1101
    %v1103 = vmul.f32 %v1080, 1.442695
    %v1104 = vpow.pop %v1103
    %v1105 = vmul.f32 %v1081, 1.442695
    %v1106 = vpow.pop %v1105
    %v1107 = vmul.f32 %v1082, 1.442695
    %v1108 = vpow.pop %v1107
    %v1109 = vmul.f32 %v1083, 1.442695
    %v1110 = vpow.pop %v1109
    %v1111 = vmul.f32 %v1084, 1.442695
    %v1112 = vpow.pop %v1111
    %v1113 = vmul.f32 %v1085, 1.442695
    %v1114 = vpow.pop %v1113
    %v1115 = vmul.f32 %v1086, 1.442695
    %v1116 = vpow.pop %v1115
    %v1117 = vmul.f32 %v1087, 1.442695
    %v1118 = vpow.pop %v1117
    %v1119 = vmul.f32 %v1088, 1.442695
    %v1120 = vpow.pop %v1119
    %1137 = vset.pattern.permute.xlu0 0
    %1138 = vperm.xlu0 %1137, %v1090
    %v1139 = vpop.permute.xlu0 %1138
    %1140 = vset.pattern.permute.xlu0 0
    %1141 = vperm.xlu0 %1140, %v1092
    %v1142 = vpop.permute.xlu0 %1141
    %1143 = vset.pattern.permute.xlu0 0
    %1144 = vperm.xlu0 %1143, %v1094
    %v1145 = vpop.permute.xlu0 %1144
    %1146 = vset.pattern.permute.xlu0 0
    %1147 = vperm.xlu0 %1146, %v1096
    %v1148 = vpop.permute.xlu0 %1147
    %1149 = vset.pattern.permute.xlu0 0
    %1150 = vperm.xlu0 %1149, %v1098
    %v1151 = vpop.permute.xlu0 %1150
    %1152 = vset.pattern.permute.xlu0 0
    %1153 = vperm.xlu0 %1152, %v1100
    %v1154 = vpop.permute.xlu0 %1153
    %1155 = vset.pattern.permute.xlu0 0
    %1156 = vperm.xlu0 %1155, %v1102
    %v1157 = vpop.permute.xlu0 %1156
    %1158 = vset.pattern.permute.xlu0 0
    %1159 = vperm.xlu0 %1158, %v1104
    %v1160 = vpop.permute.xlu0 %1159
    %1161 = vset.pattern.permute.xlu0 0
    %1162 = vperm.xlu0 %1161, %v1106
    %v1163 = vpop.permute.xlu0 %1162
    %1164 = vset.pattern.permute.xlu0 0
    %1165 = vperm.xlu0 %1164, %v1108
    %v1166 = vpop.permute.xlu0 %1165
    %1167 = vset.pattern.permute.xlu0 0
    %1168 = vperm.xlu0 %1167, %v1110
    %v1169 = vpop.permute.xlu0 %1168
    %1170 = vset.pattern.permute.xlu0 0
    %1171 = vperm.xlu0 %1170, %v1112
    %v1172 = vpop.permute.xlu0 %1171
    %1173 = vset.pattern.permute.xlu0 0
    %1174 = vperm.xlu0 %1173, %v1114
    %v1175 = vpop.permute.xlu0 %1174
    %1176 = vset.pattern.permute.xlu0 0
    %1177 = vperm.xlu0 %1176, %v1116
    %v1178 = vpop.permute.xlu0 %1177
    %1179 = vset.pattern.permute.xlu0 0
    %1180 = vperm.xlu0 %1179, %v1118
    %v1181 = vpop.permute.xlu0 %1180
    %1182 = vset.pattern.permute.xlu0 0
    %1183 = vperm.xlu0 %1182, %v1120
    %v1184 = vpop.permute.xlu0 %1183
    %v1185 = vlaneseq
    %v1186 = vshrl.u32 %v1185, 7
    %v1187 = vsub.s32 %v896, %v1186
    %v1188 = vrot.slane %v1139, %v1187
    %v1189 = vlaneseq
    %v1190 = vshrl.u32 %v1189, 7
    %v1191 = vsub.s32 %v896, %v1190
    %v1192 = vrot.slane %v1142, %v1191
    %v1193 = vlaneseq
    %v1194 = vshrl.u32 %v1193, 7
    %v1195 = vsub.s32 %v896, %v1194
    %v1196 = vrot.slane %v1145, %v1195
    %v1197 = vlaneseq
    %v1198 = vshrl.u32 %v1197, 7
    %v1199 = vsub.s32 %v896, %v1198
    %v1200 = vrot.slane %v1148, %v1199
    %v1201 = vlaneseq
    %v1202 = vshrl.u32 %v1201, 7
    %v1203 = vsub.s32 %v896, %v1202
    %v1204 = vrot.slane %v1151, %v1203
    %v1205 = vlaneseq
    %v1206 = vshrl.u32 %v1205, 7
    %v1207 = vsub.s32 %v896, %v1206
    %v1208 = vrot.slane %v1154, %v1207
    %v1209 = vlaneseq
    %v1210 = vshrl.u32 %v1209, 7
    %v1211 = vsub.s32 %v896, %v1210
    %v1212 = vrot.slane %v1157, %v1211
    %v1213 = vlaneseq
    %v1214 = vshrl.u32 %v1213, 7
    %v1215 = vsub.s32 %v896, %v1214
    %v1216 = vrot.slane %v1160, %v1215
    %v1217 = vlaneseq
    %v1218 = vshrl.u32 %v1217, 7
    %v1219 = vsub.s32 %v896, %v1218
    %v1220 = vrot.slane %v1163, %v1219
    %v1221 = vlaneseq
    %v1222 = vshrl.u32 %v1221, 7
    %v1223 = vsub.s32 %v896, %v1222
    %v1224 = vrot.slane %v1166, %v1223
    %v1225 = vlaneseq
    %v1226 = vshrl.u32 %v1225, 7
    %v1227 = vsub.s32 %v896, %v1226
    %v1228 = vrot.slane %v1169, %v1227
    %v1229 = vlaneseq
    %v1230 = vshrl.u32 %v1229, 7
    %v1231 = vsub.s32 %v896, %v1230
    %v1232 = vrot.slane %v1172, %v1231
    %v1233 = vlaneseq
    %v1234 = vshrl.u32 %v1233, 7
    %v1235 = vsub.s32 %v896, %v1234
    %v1236 = vrot.slane %v1175, %v1235
    %v1237 = vlaneseq
    %v1238 = vshrl.u32 %v1237, 7
    %v1239 = vsub.s32 %v896, %v1238
    %v1240 = vrot.slane %v1178, %v1239
    %v1241 = vlaneseq
    %v1242 = vshrl.u32 %v1241, 7
    %v1243 = vsub.s32 %v896, %v1242
    %v1244 = vrot.slane %v1181, %v1243
    %v1245 = vlaneseq
    %v1246 = vshrl.u32 %v1245, 7
    %v1247 = vsub.s32 %v896, %v1246
    %v1248 = vrot.slane %v1184, %v1247
    %v1249 = vsel %vm961, %v1192, %v1188
    %v1250 = vsel %vm963, %v1196, %v1249
    %v1251 = vsel %vm965, %v1200, %v1250
    %v1252 = vsel %vm967, %v1204, %v1251
    %v1253 = vsel %vm969, %v1208, %v1252
    %v1254 = vsel %vm971, %v1212, %v1253
    %v1255 = vsel %vm973, %v1216, %v1254
    %v1256 = vsel %vm961, %v1224, %v1220
    %v1257 = vsel %vm963, %v1228, %v1256
    %v1258 = vsel %vm965, %v1232, %v1257
    %v1259 = vsel %vm967, %v1236, %v1258
    %v1260 = vsel %vm969, %v1240, %v1259
    %v1261 = vsel %vm971, %v1244, %v1260
    %v1262 = vsel %vm973, %v1248, %v1261
    %v1265 = vsel %vm984, %v1255, 0.0
    %1266 = vadd.xlane.f32.xlu0 %v1265
    %v1267 = vpop.xlane.xlu0 %1266
    %v1268 = vsel %vm984, %v1262, 0.0
    %1269 = vadd.xlane.f32.xlu0 %v1268
    %v1270 = vpop.xlane.xlu0 %1269
    %v1271 = vrcp.pop %v1267
    %v1272 = vrcp.pop %v1270
    %v1275 = vlaneseq
    %v1276 = vshrl.u32 %v1275, 7
    %v1277 = vsub.s32 0, %v1276
    %v1278 = vrot.slane %v1271, %v1277
    %v1279 = vlaneseq
    %v1280 = vshrl.u32 %v1279, 7
    %v1281 = vsub.s32 1, %v1280
    %v1282 = vrot.slane %v1271, %v1281
    %v1283 = vlaneseq
    %v1284 = vshrl.u32 %v1283, 7
    %v1285 = vsub.s32 2, %v1284
    %v1286 = vrot.slane %v1271, %v1285
    %v1287 = vlaneseq
    %v1288 = vshrl.u32 %v1287, 7
    %v1289 = vsub.s32 3, %v1288
    %v1290 = vrot.slane %v1271, %v1289
    %v1291 = vlaneseq
    %v1292 = vshrl.u32 %v1291, 7
    %v1293 = vsub.s32 4, %v1292
    %v1294 = vrot.slane %v1271, %v1293
    %v1295 = vlaneseq
    %v1296 = vshrl.u32 %v1295, 7
    %v1297 = vsub.s32 5, %v1296
    %v1298 = vrot.slane %v1271, %v1297
    %v1299 = vlaneseq
    %v1300 = vshrl.u32 %v1299, 7
    %v1301 = vsub.s32 6, %v1300
    %v1302 = vrot.slane %v1271, %v1301
    %v1303 = vlaneseq
    %v1304 = vshrl.u32 %v1303, 7
    %v1305 = vsub.s32 7, %v1304
    %v1306 = vrot.slane %v1271, %v1305
    %v1307 = vlaneseq
    %v1308 = vshrl.u32 %v1307, 7
    %v1309 = vsub.s32 0, %v1308
    %v1310 = vrot.slane %v1272, %v1309
    %v1311 = vlaneseq
    %v1312 = vshrl.u32 %v1311, 7
    %v1313 = vsub.s32 1, %v1312
    %v1314 = vrot.slane %v1272, %v1313
    %v1315 = vlaneseq
    %v1316 = vshrl.u32 %v1315, 7
    %v1317 = vsub.s32 2, %v1316
    %v1318 = vrot.slane %v1272, %v1317
    %v1319 = vlaneseq
    %v1320 = vshrl.u32 %v1319, 7
    %v1321 = vsub.s32 3, %v1320
    %v1322 = vrot.slane %v1272, %v1321
    %v1323 = vlaneseq
    %v1324 = vshrl.u32 %v1323, 7
    %v1325 = vsub.s32 4, %v1324
    %v1326 = vrot.slane %v1272, %v1325
    %v1327 = vlaneseq
    %v1328 = vshrl.u32 %v1327, 7
    %v1329 = vsub.s32 5, %v1328
    %v1330 = vrot.slane %v1272, %v1329
    %v1331 = vlaneseq
    %v1332 = vshrl.u32 %v1331, 7
    %v1333 = vsub.s32 6, %v1332
    %v1334 = vrot.slane %v1272, %v1333
    %v1335 = vlaneseq
    %v1336 = vshrl.u32 %v1335, 7
    %v1337 = vsub.s32 7, %v1336
    %v1338 = vrot.slane %v1272, %v1337
    %v1355 = vmul.f32 %v1090, %v1278
    %v1356 = vmul.f32 %v1092, %v1282
    %v1357 = vmul.f32 %v1094, %v1286
    %v1358 = vmul.f32 %v1096, %v1290
    %v1359 = vmul.f32 %v1098, %v1294
    %v1360 = vmul.f32 %v1100, %v1298
    %v1361 = vmul.f32 %v1102, %v1302
    %v1362 = vmul.f32 %v1104, %v1306
    %v1363 = vmul.f32 %v1106, %v1310
    %v1364 = vmul.f32 %v1108, %v1314
    %v1365 = vmul.f32 %v1110, %v1318
    %v1366 = vmul.f32 %v1112, %v1322
    %v1367 = vmul.f32 %v1114, %v1326
    %v1368 = vmul.f32 %v1116, %v1330
    %v1369 = vmul.f32 %v1118, %v1334
    %v1370 = vmul.f32 %v1120, %v1338
    %1372 = vset.pattern.permute.xlu0 0
    %1373 = vperm.xlu0 %1372, %v1355
    %v1374 = vpop.permute.xlu0 %1373
    %1377 = vset.pattern.permute.xlu0 0
    %1378 = vperm.xlu0 %1377, %v1356
    %v1379 = vpop.permute.xlu0 %1378
    %1382 = vset.pattern.permute.xlu0 0
    %1383 = vperm.xlu0 %1382, %v1357
    %v1384 = vpop.permute.xlu0 %1383
    %1387 = vset.pattern.permute.xlu0 0
    %1388 = vperm.xlu0 %1387, %v1358
    %v1389 = vpop.permute.xlu0 %1388
    %1392 = vset.pattern.permute.xlu0 0
    %1393 = vperm.xlu0 %1392, %v1359
    %v1394 = vpop.permute.xlu0 %1393
    %1397 = vset.pattern.permute.xlu0 0
    %1398 = vperm.xlu0 %1397, %v1360
    %v1399 = vpop.permute.xlu0 %1398
    %1402 = vset.pattern.permute.xlu0 0
    %1403 = vperm.xlu0 %1402, %v1361
    %v1404 = vpop.permute.xlu0 %1403
    %1407 = vset.pattern.permute.xlu0 0
    %1408 = vperm.xlu0 %1407, %v1362
    %v1409 = vpop.permute.xlu0 %1408
    %1412 = vset.pattern.permute.xlu0 0
    %1413 = vperm.xlu0 %1412, %v1363
    %v1414 = vpop.permute.xlu0 %1413
    %1417 = vset.pattern.permute.xlu0 0
    %1418 = vperm.xlu0 %1417, %v1364
    %v1419 = vpop.permute.xlu0 %1418
    %1422 = vset.pattern.permute.xlu0 0
    %1423 = vperm.xlu0 %1422, %v1365
    %v1424 = vpop.permute.xlu0 %1423
    %1427 = vset.pattern.permute.xlu0 0
    %1428 = vperm.xlu0 %1427, %v1366
    %v1429 = vpop.permute.xlu0 %1428
    %1432 = vset.pattern.permute.xlu0 0
    %1433 = vperm.xlu0 %1432, %v1367
    %v1434 = vpop.permute.xlu0 %1433
    %1437 = vset.pattern.permute.xlu0 0
    %1438 = vperm.xlu0 %1437, %v1368
    %v1439 = vpop.permute.xlu0 %1438
    %1442 = vset.pattern.permute.xlu0 0
    %1443 = vperm.xlu0 %1442, %v1369
    %v1444 = vpop.permute.xlu0 %1443
    %1447 = vset.pattern.permute.xlu0 0
    %1448 = vperm.xlu0 %1447, %v1370
    %v1449 = vpop.permute.xlu0 %1448
    %v1451 = vmul.f32 %v1374, %v624
    %v1452 = vmul.f32 %v1379, %v625
    %v1453 = vmul.f32 %v1384, %v626
    %v1454 = vmul.f32 %v1389, %v627
    %v1455 = vmul.f32 %v1394, %v628
    %v1456 = vmul.f32 %v1399, %v629
    %v1457 = vmul.f32 %v1404, %v630
    %v1458 = vmul.f32 %v1409, %v631
    %v1459 = vmul.f32 %v1414, %v632
    %v1460 = vmul.f32 %v1419, %v633
    %v1461 = vmul.f32 %v1424, %v634
    %v1462 = vmul.f32 %v1429, %v635
    %v1463 = vmul.f32 %v1434, %v636
    %v1464 = vmul.f32 %v1439, %v637
    %v1465 = vmul.f32 %v1444, %v638
    %v1466 = vmul.f32 %v1449, %v639
    %v1467 = vsel %vm398, %v1451, 0.0
    %v1468 = vrot.slane %v1467, 4
    %v1469 = vadd.f32 %v1467, %v1468
    %v1470 = vrot.slane %v1469, 2
    %v1471 = vadd.f32 %v1469, %v1470
    %v1472 = vrot.slane %v1471, 1
    %v1473 = vadd.f32 %v1471, %v1472
    %v1474 = vsel %vm398, %v1452, 0.0
    %v1475 = vrot.slane %v1474, 4
    %v1476 = vadd.f32 %v1474, %v1475
    %v1477 = vrot.slane %v1476, 2
    %v1478 = vadd.f32 %v1476, %v1477
    %v1479 = vrot.slane %v1478, 1
    %v1480 = vadd.f32 %v1478, %v1479
    %v1481 = vsel %vm398, %v1453, 0.0
    %v1482 = vrot.slane %v1481, 4
    %v1483 = vadd.f32 %v1481, %v1482
    %v1484 = vrot.slane %v1483, 2
    %v1485 = vadd.f32 %v1483, %v1484
    %v1486 = vrot.slane %v1485, 1
    %v1487 = vadd.f32 %v1485, %v1486
    %v1488 = vsel %vm398, %v1454, 0.0
    %v1489 = vrot.slane %v1488, 4
    %v1490 = vadd.f32 %v1488, %v1489
    %v1491 = vrot.slane %v1490, 2
    %v1492 = vadd.f32 %v1490, %v1491
    %v1493 = vrot.slane %v1492, 1
    %v1494 = vadd.f32 %v1492, %v1493
    %v1495 = vsel %vm398, %v1455, 0.0
    %v1496 = vrot.slane %v1495, 4
    %v1497 = vadd.f32 %v1495, %v1496
    %v1498 = vrot.slane %v1497, 2
    %v1499 = vadd.f32 %v1497, %v1498
    %v1500 = vrot.slane %v1499, 1
    %v1501 = vadd.f32 %v1499, %v1500
    %v1502 = vsel %vm398, %v1456, 0.0
    %v1503 = vrot.slane %v1502, 4
    %v1504 = vadd.f32 %v1502, %v1503
    %v1505 = vrot.slane %v1504, 2
    %v1506 = vadd.f32 %v1504, %v1505
    %v1507 = vrot.slane %v1506, 1
    %v1508 = vadd.f32 %v1506, %v1507
    %v1509 = vsel %vm398, %v1457, 0.0
    %v1510 = vrot.slane %v1509, 4
    %v1511 = vadd.f32 %v1509, %v1510
    %v1512 = vrot.slane %v1511, 2
    %v1513 = vadd.f32 %v1511, %v1512
    %v1514 = vrot.slane %v1513, 1
    %v1515 = vadd.f32 %v1513, %v1514
    %v1516 = vsel %vm398, %v1458, 0.0
    %v1517 = vrot.slane %v1516, 4
    %v1518 = vadd.f32 %v1516, %v1517
    %v1519 = vrot.slane %v1518, 2
    %v1520 = vadd.f32 %v1518, %v1519
    %v1521 = vrot.slane %v1520, 1
    %v1522 = vadd.f32 %v1520, %v1521
    %v1523 = vsel %vm398, %v1459, 0.0
    %v1524 = vrot.slane %v1523, 4
    %v1525 = vadd.f32 %v1523, %v1524
    %v1526 = vrot.slane %v1525, 2
    %v1527 = vadd.f32 %v1525, %v1526
    %v1528 = vrot.slane %v1527, 1
    %v1529 = vadd.f32 %v1527, %v1528
    %v1530 = vsel %vm398, %v1460, 0.0
    %v1531 = vrot.slane %v1530, 4
    %v1532 = vadd.f32 %v1530, %v1531
    %v1533 = vrot.slane %v1532, 2
    %v1534 = vadd.f32 %v1532, %v1533
    %v1535 = vrot.slane %v1534, 1
    %v1536 = vadd.f32 %v1534, %v1535
    %v1537 = vsel %vm398, %v1461, 0.0
    %v1538 = vrot.slane %v1537, 4
    %v1539 = vadd.f32 %v1537, %v1538
    %v1540 = vrot.slane %v1539, 2
    %v1541 = vadd.f32 %v1539, %v1540
    %v1542 = vrot.slane %v1541, 1
    %v1543 = vadd.f32 %v1541, %v1542
    %v1544 = vsel %vm398, %v1462, 0.0
    %v1545 = vrot.slane %v1544, 4
    %v1546 = vadd.f32 %v1544, %v1545
    %v1547 = vrot.slane %v1546, 2
    %v1548 = vadd.f32 %v1546, %v1547
    %v1549 = vrot.slane %v1548, 1
    %v1550 = vadd.f32 %v1548, %v1549
    %v1551 = vsel %vm398, %v1463, 0.0
    %v1552 = vrot.slane %v1551, 4
    %v1553 = vadd.f32 %v1551, %v1552
    %v1554 = vrot.slane %v1553, 2
    %v1555 = vadd.f32 %v1553, %v1554
    %v1556 = vrot.slane %v1555, 1
    %v1557 = vadd.f32 %v1555, %v1556
    %v1558 = vsel %vm398, %v1464, 0.0
    %v1559 = vrot.slane %v1558, 4
    %v1560 = vadd.f32 %v1558, %v1559
    %v1561 = vrot.slane %v1560, 2
    %v1562 = vadd.f32 %v1560, %v1561
    %v1563 = vrot.slane %v1562, 1
    %v1564 = vadd.f32 %v1562, %v1563
    %v1565 = vsel %vm398, %v1465, 0.0
    %v1566 = vrot.slane %v1565, 4
    %v1567 = vadd.f32 %v1565, %v1566
    %v1568 = vrot.slane %v1567, 2
    %v1569 = vadd.f32 %v1567, %v1568
    %v1570 = vrot.slane %v1569, 1
    %v1571 = vadd.f32 %v1569, %v1570
    %v1572 = vsel %vm398, %v1466, 0.0
    %v1573 = vrot.slane %v1572, 4
    %v1574 = vadd.f32 %v1572, %v1573
    %v1575 = vrot.slane %v1574, 2
    %v1576 = vadd.f32 %v1574, %v1575
    %v1577 = vrot.slane %v1576, 1
    %v1578 = vadd.f32 %v1576, %v1577
    %v1595 = vsel %vm961, %v1480, %v1473
    %v1596 = vsel %vm963, %v1487, %v1595
    %v1597 = vsel %vm965, %v1494, %v1596
    %v1598 = vsel %vm967, %v1501, %v1597
    %v1599 = vsel %vm969, %v1508, %v1598
    %v1600 = vsel %vm971, %v1515, %v1599
    %v1601 = vsel %vm973, %v1522, %v1600
    %v1602 = vsel %vm961, %v1536, %v1529
    %v1603 = vsel %vm963, %v1543, %v1602
    %v1604 = vsel %vm965, %v1550, %v1603
    %v1605 = vsel %vm967, %v1557, %v1604
    %v1606 = vsel %vm969, %v1564, %v1605
    %v1607 = vsel %vm971, %v1571, %v1606
    %v1608 = vsel %vm973, %v1578, %v1607
    %v1611 = vsel %vm398, %v1601, 0.0
    %1612 = vadd.xlane.f32.xlu0 %v1611
    %v1613 = vpop.xlane.xlu0 %1612
    %v1614 = vsel %vm398, %v1608, 0.0
    %1615 = vadd.xlane.f32.xlu0 %v1614
    %v1616 = vpop.xlane.xlu0 %1615
    %v1617 = vrcp.pop 32.0
    %v1618 = vmul.f32 %v1613, %v1617
    %v1619 = vmul.f32 %v1616, %v1617
    %v1622 = vrot.slane %v1618, 1
    %v1623 = vrot.slane %v1618, 2
    %v1624 = vrot.slane %v1618, 3
    %v1625 = vrot.slane %v1618, 4
    %v1626 = vrot.slane %v1618, 5
    %v1627 = vrot.slane %v1618, 6
    %v1628 = vrot.slane %v1618, 7
    %v1629 = vrot.slane %v1619, 1
    %v1630 = vrot.slane %v1619, 2
    %v1631 = vrot.slane %v1619, 3
    %v1632 = vrot.slane %v1619, 4
    %v1633 = vrot.slane %v1619, 5
    %v1634 = vrot.slane %v1619, 6
    %v1635 = vrot.slane %v1619, 7
    %v1652 = vsub.f32 %v1473, %v1618
    %v1653 = vsub.f32 %v1480, %v1622
    %v1654 = vsub.f32 %v1487, %v1623
    %v1655 = vsub.f32 %v1494, %v1624
    %v1656 = vsub.f32 %v1501, %v1625
    %v1657 = vsub.f32 %v1508, %v1626
    %v1658 = vsub.f32 %v1515, %v1627
    %v1659 = vsub.f32 %v1522, %v1628
    %v1660 = vsub.f32 %v1529, %v1619
    %v1661 = vsub.f32 %v1536, %v1629
    %v1662 = vsub.f32 %v1543, %v1630
    %v1663 = vsub.f32 %v1550, %v1631
    %v1664 = vsub.f32 %v1557, %v1632
    %v1665 = vsub.f32 %v1564, %v1633
    %v1666 = vsub.f32 %v1571, %v1634
    %v1667 = vsub.f32 %v1578, %v1635
    %v1668 = vmul.f32 %v1652, %v1652
    %v1669 = vmul.f32 %v1653, %v1653
    %v1670 = vmul.f32 %v1654, %v1654
    %v1671 = vmul.f32 %v1655, %v1655
    %v1672 = vmul.f32 %v1656, %v1656
    %v1673 = vmul.f32 %v1657, %v1657
    %v1674 = vmul.f32 %v1658, %v1658
    %v1675 = vmul.f32 %v1659, %v1659
    %v1676 = vmul.f32 %v1660, %v1660
    %v1677 = vmul.f32 %v1661, %v1661
    %v1678 = vmul.f32 %v1662, %v1662
    %v1679 = vmul.f32 %v1663, %v1663
    %v1680 = vmul.f32 %v1664, %v1664
    %v1681 = vmul.f32 %v1665, %v1665
    %v1682 = vmul.f32 %v1666, %v1666
    %v1683 = vmul.f32 %v1667, %v1667
    %v1700 = vrot.slane %v1669, 7
    %v1701 = vsel %vm961, %v1700, %v1668
    %v1702 = vrot.slane %v1670, 6
    %v1703 = vsel %vm963, %v1702, %v1701
    %v1704 = vrot.slane %v1671, 5
    %v1705 = vsel %vm965, %v1704, %v1703
    %v1706 = vrot.slane %v1672, 4
    %v1707 = vsel %vm967, %v1706, %v1705
    %v1708 = vrot.slane %v1673, 3
    %v1709 = vsel %vm969, %v1708, %v1707
    %v1710 = vrot.slane %v1674, 2
    %v1711 = vsel %vm971, %v1710, %v1709
    %v1712 = vrot.slane %v1675, 1
    %v1713 = vsel %vm973, %v1712, %v1711
    %v1714 = vrot.slane %v1677, 7
    %v1715 = vsel %vm961, %v1714, %v1676
    %v1716 = vrot.slane %v1678, 6
    %v1717 = vsel %vm963, %v1716, %v1715
    %v1718 = vrot.slane %v1679, 5
    %v1719 = vsel %vm965, %v1718, %v1717
    %v1720 = vrot.slane %v1680, 4
    %v1721 = vsel %vm967, %v1720, %v1719
    %v1722 = vrot.slane %v1681, 3
    %v1723 = vsel %vm969, %v1722, %v1721
    %v1724 = vrot.slane %v1682, 2
    %v1725 = vsel %vm971, %v1724, %v1723
    %v1726 = vrot.slane %v1683, 1
    %v1727 = vsel %vm973, %v1726, %v1725
    %v1730 = vsel %vm398, %v1713, 0.0
    %1731 = vadd.xlane.f32.xlu0 %v1730
    %v1732 = vpop.xlane.xlu0 %1731
    %v1733 = vsel %vm398, %v1727, 0.0
    %1734 = vadd.xlane.f32.xlu0 %v1733
    %v1735 = vpop.xlane.xlu0 %1734
    %v1736 = vmul.f32 %v1732, %v1617
    %v1737 = vmul.f32 %v1735, %v1617
    %v1738 = vadd.f32 %v1736, 1e-05
    %v1739 = vadd.f32 %v1737, 1e-05
    %v1740 = vrsqrt.pop %v1738
    %v1741 = vrsqrt.pop %v1739
    %v1744 = vrot.slane %v1740, 1
    %v1745 = vrot.slane %v1740, 2
    %v1746 = vrot.slane %v1740, 3
    %v1747 = vrot.slane %v1740, 4
    %v1748 = vrot.slane %v1740, 5
    %v1749 = vrot.slane %v1740, 6
    %v1750 = vrot.slane %v1740, 7
    %v1751 = vrot.slane %v1741, 1
    %v1752 = vrot.slane %v1741, 2
    %v1753 = vrot.slane %v1741, 3
    %v1754 = vrot.slane %v1741, 4
    %v1755 = vrot.slane %v1741, 5
    %v1756 = vrot.slane %v1741, 6
    %v1757 = vrot.slane %v1741, 7
    %v1774 = vmul.f32 %v1652, %v1740
    %v1775 = vmul.f32 %v1653, %v1744
    %v1776 = vmul.f32 %v1654, %v1745
    %v1777 = vmul.f32 %v1655, %v1746
    %v1778 = vmul.f32 %v1656, %v1747
    %v1779 = vmul.f32 %v1657, %v1748
    %v1780 = vmul.f32 %v1658, %v1749
    %v1781 = vmul.f32 %v1659, %v1750
    %v1782 = vmul.f32 %v1660, %v1741
    %v1783 = vmul.f32 %v1661, %v1751
    %v1784 = vmul.f32 %v1662, %v1752
    %v1785 = vmul.f32 %v1663, %v1753
    %v1786 = vmul.f32 %v1664, %v1754
    %v1787 = vmul.f32 %v1665, %v1755
    %v1788 = vmul.f32 %v1666, %v1756
    %v1789 = vmul.f32 %v1667, %v1757
    %v1790 = vld [vmem:[%s7] sm:$0x1]
    %v1792 = vlaneseq
    %v1793 = vshrl.u32 %v1792, 7
    %v1794 = vsub.s32 0, %v1793
    %v1795 = vrot.slane %v1790, %v1794
    %v1797 = vmul.f32 %v1774, %v1795
    %v1798 = vmul.f32 %v1775, %v1795
    %v1799 = vmul.f32 %v1776, %v1795
    %v1800 = vmul.f32 %v1777, %v1795
    %v1801 = vmul.f32 %v1778, %v1795
    %v1802 = vmul.f32 %v1779, %v1795
    %v1803 = vmul.f32 %v1780, %v1795
    %v1804 = vmul.f32 %v1781, %v1795
    %v1805 = vmul.f32 %v1782, %v1795
    %v1806 = vmul.f32 %v1783, %v1795
    %v1807 = vmul.f32 %v1784, %v1795
    %v1808 = vmul.f32 %v1785, %v1795
    %v1809 = vmul.f32 %v1786, %v1795
    %v1810 = vmul.f32 %v1787, %v1795
    %v1811 = vmul.f32 %v1788, %v1795
    %v1812 = vmul.f32 %v1789, %v1795
    %v1813 = vld [vmem:[%s8] sm:$0x1]
    %v1815 = vlaneseq
    %v1816 = vshrl.u32 %v1815, 7
    %v1817 = vsub.s32 0, %v1816
    %v1818 = vrot.slane %v1813, %v1817
    %v1820 = vadd.f32 %v1797, %v1818
    %v1821 = vadd.f32 %v1798, %v1818
    %v1822 = vadd.f32 %v1799, %v1818
    %v1823 = vadd.f32 %v1800, %v1818
    %v1824 = vadd.f32 %v1801, %v1818
    %v1825 = vadd.f32 %v1802, %v1818
    %v1826 = vadd.f32 %v1803, %v1818
    %v1827 = vadd.f32 %v1804, %v1818
    %v1828 = vadd.f32 %v1805, %v1818
    %v1829 = vadd.f32 %v1806, %v1818
    %v1830 = vadd.f32 %v1807, %v1818
    %v1831 = vadd.f32 %v1808, %v1818
    %v1832 = vadd.f32 %v1809, %v1818
    %v1833 = vadd.f32 %v1810, %v1818
    %v1834 = vadd.f32 %v1811, %v1818
    %v1835 = vadd.f32 %v1812, %v1818
    %s1836 = smul.u32 0, 16
    %v1853 = vrot.slane %v1821, 7
    %v1854 = vsel %vm961, %v1853, %v1820
    %v1855 = vrot.slane %v1822, 6
    %v1856 = vsel %vm963, %v1855, %v1854
    %v1857 = vrot.slane %v1823, 5
    %v1858 = vsel %vm965, %v1857, %v1856
    %v1859 = vrot.slane %v1824, 4
    %v1860 = vsel %vm967, %v1859, %v1858
    %v1861 = vrot.slane %v1825, 3
    %v1862 = vsel %vm969, %v1861, %v1860
    %v1863 = vrot.slane %v1826, 2
    %v1864 = vsel %vm971, %v1863, %v1862
    %v1865 = vrot.slane %v1827, 1
    %v1866 = vsel %vm973, %v1865, %v1864
    %v1867 = vrot.slane %v1829, 7
    %v1868 = vsel %vm961, %v1867, %v1828
    %v1869 = vrot.slane %v1830, 6
    %v1870 = vsel %vm963, %v1869, %v1868
    %v1871 = vrot.slane %v1831, 5
    %v1872 = vsel %vm965, %v1871, %v1870
    %v1873 = vrot.slane %v1832, 4
    %v1874 = vsel %vm967, %v1873, %v1872
    %v1875 = vrot.slane %v1833, 3
    %v1876 = vsel %vm969, %v1875, %v1874
    %v1877 = vrot.slane %v1834, 2
    %v1878 = vsel %vm971, %v1877, %v1876
    %v1879 = vrot.slane %v1835, 1
    %v1880 = vsel %vm973, %v1879, %v1878
    %s1883 = scalar_lea.vmem [#allocation2], %s1836
    %1884 = vst.msk [vmem:[%s1883] sm:$0xff] %vm398, %v1866
    %1885 = vst.msk [vmem:[%s1883 + $0x8] sm:$0xff] %vm398, %v1880
    %p1886 = scmp.eq.s32.totalorder 0, 0
    // Predicated region
    $region50: #{user_encoder_forward.1} parent=1 // pred_check
      %p1887 = pneg %p1886
    $region51: #{user_encoder_forward.1} parent=1 // pred_check_branch
      %1889 = sbr.rel (%p1887) target = $region53
    $region52: #{user_encoder_forward.1} parent=1 // pred_region
      %s1890 = sld [smem:[#allocation5]]
      %v1891 = vld [vmem:[#allocation2] sm:$0xff]
      %v1892 = vld [vmem:[#allocation2 + $0x8] sm:$0xff]
      %v1893 = vpack.c.bf16 %v1892, %v1891
      %v1894 = vld [vmem:[%s9] sm:$0xf]
      %v1895 = vld [vmem:[%s9 + $0x4] sm:$0xf]
      %v1896 = vld [vmem:[%s9 + $0x8] sm:$0xf]
      %v1897 = vld [vmem:[%s9 + $0xc] sm:$0xf]
      %v1898 = vld [vmem:[%s11] sm:$0x1]
      %v1900 = vlaneseq
      %v1901 = vshrl.u32 %v1900, 7
      %v1902 = vsub.s32 0, %v1901
      %v1903 = vrot.slane %v1898, %v1902
      %v1909 = vunpack.c.l.b16 %v1894
      %v1910 = vunpack.c.l.b16 %v1895
      %v1911 = vunpack.c.l.b16 %v1896
      %v1912 = vunpack.c.l.b16 %v1897
      %v1913 = vpack.c.b16 %v1910, %v1909
      %v1914 = vpack.c.b16 %v1912, %v1911
      %v1918 = vsel %vm398, %v1893, 0
      %1920 = vmatprep.subr.bf16.mxu0 0
      %1921 = vmatpush1.bf16.msra.mxu0 %v1913
      %1922 = vmatprep.subr.bf16.mxu0 0
      %1923 = vmatpush1.bf16.msra.mxu0 %v1914
      %1924 = vmatprep.subr.bf16.mxu0 0
      %1925 = vmatpush1.bf16.msra.mxu0 0
      %1926 = vmatprep.subr.bf16.mxu0 0
      %1927 = vmatpush1.bf16.msra.mxu0 0
      %1928 = vmatprep.subr.bf16.mxu0 0
      %1929 = vmatpush1.bf16.msra.mxu0 0
      %1930 = vmatprep.subr.bf16.mxu0 0
      %1931 = vmatpush1.bf16.msra.mxu0 0
      %1932 = vmatprep.subr.bf16.mxu0 0
      %1933 = vmatpush1.bf16.msra.mxu0 0
      %1934 = vmatprep.subr.bf16.mxu0 0
      %1935 = vmatpush1.bf16.msra.mxu0 0
      %1936 = vmatprep.subr.bf16.mxu0 0
      %1937 = vmatpush1.bf16.msra.mxu0 0
      %1938 = vmatprep.subr.bf16.mxu0 0
      %1939 = vmatpush1.bf16.msra.mxu0 0
      %1940 = vmatprep.subr.bf16.mxu0 0
      %1941 = vmatpush1.bf16.msra.mxu0 0
      %1942 = vmatprep.subr.bf16.mxu0 0
      %1943 = vmatpush1.bf16.msra.mxu0 0
      %1944 = vmatprep.subr.bf16.mxu0 0
      %1945 = vmatpush1.bf16.msra.mxu0 0
      %1946 = vmatprep.subr.bf16.mxu0 0
      %1947 = vmatpush1.bf16.msra.mxu0 0
      %1948 = vmatprep.subr.bf16.mxu0 0
      %1949 = vmatpush1.bf16.msra.mxu0 0
      %1950 = vmatprep.subr.bf16.mxu0 0
      %1951 = vmatpush1.bf16.msra.mxu0 0
      %1952 = vmatprep.mubr.bf16.mxu0 0
      %1953 = vmatmul.mubr.bf16.gmra.mrb[0].mxu0 %v1918
      %v1954 = vpop.f32.mrb[0].mxu0
      %v1955 = vadd.f32 %v1903, %v1954
      %v1956 = vpop.f32.mrb[0].mxu0
      %v1957 = vpop.f32.mrb[0].mxu0
      %v1958 = vadd.f32 %v1903, %v1957
      %v1959 = vpop.f32.mrb[0].mxu0
      %1960 = vdwg.mxu0
      %vm1961 = vcmask 785408
      %1962 = vst.msk [vmem:[#allocation3] sm:$0xff] %vm1961, %v1955
      %1963 = vst.msk [vmem:[#allocation3 + $0x8] sm:$0xff] %vm1961, %v1958
      %v1964 = vld [vmem:[%s10] sm:$0xf]
      %v1965 = vld [vmem:[%s10 + $0x4] sm:$0xf]
      %v1966 = vld [vmem:[%s10 + $0x8] sm:$0xf]
      %v1967 = vld [vmem:[%s10 + $0xc] sm:$0xf]
      %v1968 = vld [vmem:[%s12] sm:$0x1]
      // While loop
      $region54: #{user_encoder_forward.1} parent=52 // loop_pre_header
        _
      $region55: #{user_encoder_forward.1} parent=52 // loop_header
        %s1970 = sphi 0, %s1972
        %p1971 = scmp.ge.s32.totalorder %s1970, %s1890
        %v1975 = vphi 0.0, %v2062
      $region56: #{user_encoder_forward.1} parent=52 // loop_header_branch
        %1974 = sbr.rel (%p1971) target = $region60
      $region57: #{user_encoder_forward.1} parent=52 // loop_body
        %v1976 = vpack.c.bf16 %v1975, %v1975
        %1978 = vrot.lane.b32.xlu0 %v1976, 96
        %v1979 = vpop.permute.xlu0 %1978
        %v1984 = vunpack.c.l.b16 %v1964
        %v1985 = vunpack.c.l.b16 %v1965
        %v1986 = vunpack.c.l.b16 %v1966
        %v1987 = vunpack.c.l.b16 %v1967
        %v1988 = vpack.c.b16 %v1985, %v1984
        %v1989 = vpack.c.b16 %v1987, %v1986
        %v1993 = vsel %vm398, %v1979, 0
        %1995 = vmatprep.subr.bf16.mxu0 0
        %1996 = vmatpush1.bf16.msra.mxu0 %v1988
        %1997 = vmatprep.subr.bf16.mxu0 0
        %1998 = vmatpush1.bf16.msra.mxu0 %v1989
        %1999 = vmatprep.subr.bf16.mxu0 0
        %2000 = vmatpush1.bf16.msra.mxu0 0
        %2001 = vmatprep.subr.bf16.mxu0 0
        %2002 = vmatpush1.bf16.msra.mxu0 0
        %2003 = vmatprep.subr.bf16.mxu0 0
        %2004 = vmatpush1.bf16.msra.mxu0 0
        %2005 = vmatprep.subr.bf16.mxu0 0
        %2006 = vmatpush1.bf16.msra.mxu0 0
        %2007 = vmatprep.subr.bf16.mxu0 0
        %2008 = vmatpush1.bf16.msra.mxu0 0
        %2009 = vmatprep.subr.bf16.mxu0 0
        %2010 = vmatpush1.bf16.msra.mxu0 0
        %2011 = vmatprep.subr.bf16.mxu0 0
        %2012 = vmatpush1.bf16.msra.mxu0 0
        %2013 = vmatprep.subr.bf16.mxu0 0
        %2014 = vmatpush1.bf16.msra.mxu0 0
        %2015 = vmatprep.subr.bf16.mxu0 0
        %2016 = vmatpush1.bf16.msra.mxu0 0
        %2017 = vmatprep.subr.bf16.mxu0 0
        %2018 = vmatpush1.bf16.msra.mxu0 0
        %2019 = vmatprep.subr.bf16.mxu0 0
        %2020 = vmatpush1.bf16.msra.mxu0 0
        %2021 = vmatprep.subr.bf16.mxu0 0
        %2022 = vmatpush1.bf16.msra.mxu0 0
        %2023 = vmatprep.subr.bf16.mxu0 0
        %2024 = vmatpush1.bf16.msra.mxu0 0
        %2025 = vmatprep.subr.bf16.mxu0 0
        %2026 = vmatpush1.bf16.msra.mxu0 0
        %2027 = vmatprep.mubr.bf16.mxu0 0
        %2028 = vmatmul.mubr.bf16.gmra.mrb[0].mxu0 %v1993
        %v2029 = vpop.f32.mrb[0].mxu0
        %v2030 = vadd.f32 %v1968, %v2029
        %v2031 = vpop.f32.mrb[0].mxu0
        %v2032 = vpop.f32.mrb[0].mxu0
        %v2033 = vpop.f32.mrb[0].mxu0
        %2034 = vdwg.mxu0
        %s2035 = scalar_lea.vmem [#allocation3], %s1970
        %v2036 = vld [vmem:[%s2035] sm:$0x1]
        %v2037 = vadd.f32 %v2036, %v2030
        %v2038 = vxor.u32 %v2037, 2147483648
        %v2039 = vmul.f32 %v2038, 1.442695
        %v2040 = vpow.pop %v2039
        %v2041 = vadd.f32 %v2040, 1.0
        %v2042 = vrcp.pop %v2041
        %v2043 = vmul.f32 1.0, %v2042
        %2045 = vrot.lane.b32.xlu0 %v2030, 64
        %v2046 = vpop.permute.xlu0 %2045
        %v2048 = vmul.f32 %v2043, %v2046
        %2050 = vrot.lane.b32.xlu0 %v2048, 64
        %v2051 = vpop.permute.xlu0 %2050
        %v2053 = vadd.f32 %v2036, %v2051
        %v2054 = vtanh.pop %v2053
        %v2055 = vsub.f32 1.0, %v2043
        %2057 = vrot.lane.b32.xlu0 %v2054, 96
        %v2058 = vpop.permute.xlu0 %2057
        %v2060 = vmul.f32 %v2055, %v2058
        %v2061 = vmul.f32 %v2043, %v1975
        %v2062 = vadd.f32 %v2060, %v2061
      $region58: #{user_encoder_forward.1} parent=52 // loop_footer
        %s1972 = sadd.s32 %s1970, 1
      $region59: #{user_encoder_forward.1} parent=52 // loop_footer_branch
        %1969 = sbr.rel target = $region55
      $region60: #{user_encoder_forward.1} parent=52 // loop_exit
        _
      %2064 = vrot.lane.b32.xlu0 %v1975, 96
      %v2065 = vpop.permute.xlu0 %2064
      %vm2067 = vcmask 253952
      %2068 = vst.msk [vmem:[#allocation6] sm:$0x1] %vm2067, %v2065
    $region53: #{user_encoder_forward.1} parent=1 // pred_fallthru
      _
    // Predicated region
    $region61: #{user_encoder_forward.1} parent=1 // pred_check
      _
    $region62: #{user_encoder_forward.1} parent=1 // pred_check_branch
      %2070 = sbr.rel (0) target = $region64
    $region63: #{user_encoder_forward.1} parent=1 // pred_region
      %s2072 = ssub.s32 16, 16
      %2073 = vsyncadd [#allocation7], %s2072
      %s2075 = sshll.u32 [#allocation6], 4
      %s2076 = int_to_ptr.vmem [resolvable:$true] %s2075
      %2078 = dma.vmem_to_hbm [thread:$0]  %s2076, 16, %s13, [#allocation7]
    $region64: #{user_encoder_forward.1} parent=1 // pred_fallthru
      _
    // Predicated region
    $region65: #{user_encoder_forward.1} parent=1 // pred_check
      _
    $region66: #{user_encoder_forward.1} parent=1 // pred_check_branch
      %2080 = sbr.rel (0) target = $region68
    $region67: #{user_encoder_forward.1} parent=1 // pred_region
      %2081 = dma.done [#allocation7], 16
    $region68: #{user_encoder_forward.1} parent=1 // pred_fallthru
      _
    %2082 = vsyncpa [#allocation7], 1

</llo_original>
